<compile_context>
chip_gen: v7x
topology: tpu7x:2x2x1
jax: 0.10.0
libtpu: 0.0.40
codegen_flags: <defaults>
</compile_context>

<pallas_src>
import functools

import jax
import jax.numpy as jnp
from jax.experimental import pallas as pl
from jax.experimental.pallas import tpu as pltpu

LM_HIDDEN_SIZE = 16


# ---------------------------------------------------------------------------
# Pallas kernel: one invocation runs the full LSTM recurrence.
# ---------------------------------------------------------------------------
def _lstm_kernel(x_ref, wih_ref, whh_ref, b_ref, h0_ref, c0_ref,
                 seq_ref, c_out_ref,
                 xp_sc, h_sc, c_sc):
    # Shapes (all static Python ints).
    B, H = h_sc.shape
    TB = x_ref.shape[0]
    T = TB // B

    # --- Preamble: hoisted input projection -------------------------------
    # X_proj = X @ W_ih^T + (b_ih + b_hh)   -> [T*B, 4H], one big MXU matmul.
    xp_sc[...] = (jnp.dot(x_ref[...], wih_ref[...],
                          preferred_element_type=jnp.float32)
                  + b_ref[...])

    # Carried state lives in VMEM scratch across the time loop.
    h_sc[...] = h0_ref[...].astype(jnp.float32)
    c_sc[...] = c0_ref[...].astype(jnp.float32)

    whh = whh_ref[...]                                   # resident [H, 4H]

    # --- Recurrence: only the serial part stays in the loop ---------------
    def step(t, carry):
        del carry
        off = pl.multiple_of(t * B, B)                   # B is a multiple of 8

        h_prev = h_sc[...]
        c_prev = c_sc[...]

        # gates = X_proj[t] + h_prev @ W_hh^T            -> [B, 4H]
        gates = (xp_sc[pl.ds(off, B), :]
                 + jnp.dot(h_prev, whh, preferred_element_type=jnp.float32))

        # Two full-vreg transcendental passes (EUP), then narrow slices.
        sig = jax.nn.sigmoid(gates)
        th = jnp.tanh(gates)
        i_g = sig[:, 0 * H:1 * H]
        f_g = sig[:, 1 * H:2 * H]
        g_g = th[:, 2 * H:3 * H]
        o_g = sig[:, 3 * H:4 * H]

        c_new = f_g * c_prev + i_g * g_g
        h_new = o_g * jnp.tanh(c_new)

        h_sc[...] = h_new
        c_sc[...] = c_new
        # Store into the VMEM-resident output block; HBM writeback happens
        # once, after the whole recurrence finishes.
        seq_ref[pl.ds(off, B), :] = h_new.astype(seq_ref.dtype)
        return 0

    jax.lax.fori_loop(0, T, step, 0, unroll=True)

    # Final cell state (final hidden state == last row-block of seq_ref).
    c_out_ref[...] = c_sc[...].astype(c_out_ref.dtype)


def _lstm_pallas(x_tbe, w_ih_t, w_hh_t, bias, h0, c0):
    """x_tbe: [T, B, E] (B already padded to a multiple of 8);
    w_ih_t: [E, 4H]; w_hh_t: [H, 4H]; bias: [1, 4H]; h0/c0: [B, H].
    Returns (seq [T, B, H], c_final [B, H])."""
    T, B, E = x_tbe.shape
    H = h0.shape[1]

    # Flatten time*batch so the hoisted projection is one big matmul and the
    # per-step slices are plain sublane-aligned windows.
    x_2d = x_tbe.reshape(T * B, E)

    grid_spec = pltpu.PrefetchScalarGridSpec(
        num_scalar_prefetch=0,
        grid=(1,),
        in_specs=[
            pl.BlockSpec((T * B, E), lambda i: (0, 0)),      # embedded inputs
            pl.BlockSpec((E, 4 * H), lambda i: (0, 0)),      # W_ih^T
            pl.BlockSpec((H, 4 * H), lambda i: (0, 0)),      # W_hh^T
            pl.BlockSpec((1, 4 * H), lambda i: (0, 0)),      # b_ih + b_hh
            pl.BlockSpec((B, H), lambda i: (0, 0)),          # h0
            pl.BlockSpec((B, H), lambda i: (0, 0)),          # c0
        ],
        out_specs=[
            pl.BlockSpec((T * B, H), lambda i: (0, 0)),      # full sequence
            pl.BlockSpec((B, H), lambda i: (0, 0)),          # final c
        ],
        scratch_shapes=[
            pltpu.VMEM((T * B, 4 * H), jnp.float32),         # hoisted X_proj
            pltpu.VMEM((B, H), jnp.float32),                 # carried h
            pltpu.VMEM((B, H), jnp.float32),                 # carried c
        ],
    )

    out_shapes = (
        jax.ShapeDtypeStruct((T * B, H), jnp.float32),
        jax.ShapeDtypeStruct((B, H), jnp.float32),
    )

    seq_2d, c_f = pl.pallas_call(
        _lstm_kernel,
        grid_spec=grid_spec,
        out_shape=out_shapes,
        compiler_params=pltpu.CompilerParams(
            dimension_semantics=("arbitrary",)),
    )(x_2d, w_ih_t, w_hh_t, bias, h0, c0)

    return seq_2d.reshape(T, B, H), c_f


# ---------------------------------------------------------------------------
# Parameter init (deterministic, mirrors LMRNN.__init__ / init_weights).
# ---------------------------------------------------------------------------
def init_lmrnn_params(key, embedding_size, hidden_size, vocab_size, out_size):
    k_emb, k_ih, k_hh, k_lin = jax.random.split(key, 4)

    def xavier_uniform(k, shape):
        fan_out, fan_in = shape
        bound = jnp.sqrt(6.0 / (fan_in + fan_out))
        return jax.random.uniform(k, shape, jnp.float32, -bound, bound)

    params = {
        # nn.Embedding default init: N(0, 1)
        "embedding": jax.random.normal(k_emb, (vocab_size, embedding_size),
                                       jnp.float32),
        # nn.LSTM weights (xavier per init_weights), biases zero (per spec)
        "w_ih": xavier_uniform(k_ih, (4 * hidden_size, embedding_size)),
        "w_hh": xavier_uniform(k_hh, (4 * hidden_size, hidden_size)),
        "b_ih": jnp.zeros((4 * hidden_size,), jnp.float32),
        "b_hh": jnp.zeros((4 * hidden_size,), jnp.float32),
        # hidden_to_out exists in __init__ but is unused in forward()
        "w_out": xavier_uniform(k_lin, (out_size, hidden_size)),
        "b_out": jnp.zeros((out_size,), jnp.float32),
    }
    return params


# ---------------------------------------------------------------------------
# Forward pass (matches LMRNN.forward semantics).
# ---------------------------------------------------------------------------
@jax.jit
def lmrnn_forward(params, x_idx, prev_hidden_state=None, prev_cell_state=None):
    """x_idx: int32 [B, T] character indices.
    Returns (sequence_hidden_state [B, T, H], hidden_state [1, B, H],
             cell_state [1, B, H])."""
    B, T = x_idx.shape
    H = params["w_hh"].shape[1]

    if prev_hidden_state is None:
        # Mirrors the PyTorch forward(), which hardcodes LM_HIDDEN_SIZE here.
        prev_hidden_state = jnp.zeros((1, B, LM_HIDDEN_SIZE), jnp.float32)
    if prev_cell_state is None:
        prev_cell_state = jnp.zeros((1, B, LM_HIDDEN_SIZE), jnp.float32)

    # Embedding lookup (glue; the gather stays in plain JAX).
    embedded = jnp.take(params["embedding"], x_idx, axis=0)   # [B, T, E]

    # Time-major layout for the kernel; pad batch to a full f32 sublane (8).
    x_tbe = jnp.transpose(embedded, (1, 0, 2))                # [T, B, E]
    B_pad = ((B + 7) // 8) * 8
    h0 = prev_hidden_state[0]
    c0 = prev_cell_state[0]
    if B_pad != B:
        pad = B_pad - B
        x_tbe = jnp.pad(x_tbe, ((0, 0), (0, pad), (0, 0)))
        h0 = jnp.pad(h0, ((0, pad), (0, 0)))
        c0 = jnp.pad(c0, ((0, pad), (0, 0)))

    # Pre-arrange weights: W^T for row-major MXU matmuls, biases folded once.
    w_ih_t = params["w_ih"].T                                 # [E, 4H]
    w_hh_t = params["w_hh"].T                                 # [H, 4H]
    bias = (params["b_ih"] + params["b_hh"]).reshape(1, 4 * H)

    seq_tbh, c_f = _lstm_pallas(x_tbe, w_ih_t, w_hh_t, bias, h0, c0)

    seq_tbh = seq_tbh[:, :B, :]                               # strip batch pad
    sequence_hidden_state = jnp.transpose(seq_tbh, (1, 0, 2))  # [B, T, H]
    hidden_state = sequence_hidden_state[:, -1, :][None, :, :]  # final h == seq[T-1]
    cell_state = c_f[:B][None, :, :]                           # [1, B, H]
    return sequence_hidden_state, hidden_state, cell_state


if __name__ == "__main__":
    key = jax.random.PRNGKey(0)

    embedding_size = 32
    hidden_size = LM_HIDDEN_SIZE   # forward() hardcodes LM_HIDDEN_SIZE states
    vocab_size = 50
    out_size = 2
    batch = 2
    seq_len = 8

    params = init_lmrnn_params(key, embedding_size, hidden_size,
                               vocab_size, out_size)

    x_idx = jax.random.randint(jax.random.PRNGKey(1), (batch, seq_len),
                               0, vocab_size, dtype=jnp.int32)

    seq_h, h_n, c_n = lmrnn_forward(params, x_idx)
    jax.block_until_ready((seq_h, h_n, c_n))

    assert seq_h.shape == (batch, seq_len, hidden_size)
    assert h_n.shape == (1, batch, hidden_size)
    assert c_n.shape == (1, batch, hidden_size)
    assert bool(jnp.all(jnp.isfinite(seq_h)))
    assert bool(jnp.all(jnp.isfinite(h_n))) and bool(jnp.all(jnp.isfinite(c_n)))
    # Final hidden state must equal the last sequence step (LSTM invariant).
    assert bool(jnp.allclose(h_n[0], seq_h[:, -1, :], atol=1e-6))

    print("KERNEL_OK")
</pallas_src>

<mosaic_0001>
module attributes {stable_mosaic.version = 11 : i64} {
  func.func @_lstm_kernel(%arg0: i32, %arg1: memref<64x32xf32, #tpu.memory_space<vmem>>, %arg2: memref<32x64xf32, #tpu.memory_space<vmem>>, %arg3: memref<16x64xf32, #tpu.memory_space<vmem>>, %arg4: memref<1x64xf32, #tpu.memory_space<vmem>>, %arg5: memref<8x16xf32, #tpu.memory_space<vmem>>, %arg6: memref<8x16xf32, #tpu.memory_space<vmem>>, %arg7: memref<64x16xf32, #tpu.memory_space<vmem>>, %arg8: memref<8x16xf32, #tpu.memory_space<vmem>>, %arg9: memref<64x64xf32, #tpu.memory_space<vmem>>, %arg10: memref<8x16xf32, #tpu.memory_space<vmem>>, %arg11: memref<8x16xf32, #tpu.memory_space<vmem>>) attributes {dimension_semantics = [#tpu.dimension_semantics<arbitrary>], iteration_bounds = array<i64: 1>, scalar_prefetch = 0 : i64, scratch_operands = 3 : i64, tpu.core_type = #tpu.core_type<tc>, window_params = [{pipeline_mode = #tpu.pipeline_mode<synchronous>, transform_indices = @transform_0, window_bounds = array<i64: 64, 32>}, {pipeline_mode = #tpu.pipeline_mode<synchronous>, transform_indices = @transform_1, window_bounds = array<i64: 32, 64>}, {pipeline_mode = #tpu.pipeline_mode<synchronous>, transform_indices = @transform_2, window_bounds = array<i64: 16, 64>}, {pipeline_mode = #tpu.pipeline_mode<synchronous>, transform_indices = @transform_3, window_bounds = array<i64: 1, 64>}, {pipeline_mode = #tpu.pipeline_mode<synchronous>, transform_indices = @transform_4, window_bounds = array<i64: 8, 16>}, {pipeline_mode = #tpu.pipeline_mode<synchronous>, transform_indices = @transform_5, window_bounds = array<i64: 8, 16>}, {pipeline_mode = #tpu.pipeline_mode<synchronous>, transform_indices = @transform_6, window_bounds = array<i64: 64, 16>}, {pipeline_mode = #tpu.pipeline_mode<synchronous>, transform_indices = @transform_7, window_bounds = array<i64: 8, 16>}]} {
    %c0 = arith.constant 0 : index
    %c0_0 = arith.constant 0 : index
    %0 = vector.load %arg1[%c0, %c0_0] : memref<64x32xf32, #tpu.memory_space<vmem>>, vector<64x32xf32>
    %c0_1 = arith.constant 0 : index
    %c0_2 = arith.constant 0 : index
    %1 = vector.load %arg2[%c0_1, %c0_2] : memref<32x64xf32, #tpu.memory_space<vmem>>, vector<32x64xf32>
    %cst = arith.constant dense<0.000000e+00> : vector<64x64xf32>
    %2 = tpu.matmul %0, %1, %cst {dimension_numbers = #tpu.dot_dimension_numbers<[1], [0], [0], [1], [0, 0, 1, 1], [], []>} : vector<64x32xf32>, vector<32x64xf32>, vector<64x64xf32> -> vector<64x64xf32>
    %c0_3 = arith.constant 0 : index
    %c0_4 = arith.constant 0 : index
    %3 = vector.load %arg4[%c0_3, %c0_4] : memref<1x64xf32, #tpu.memory_space<vmem>>, vector<1x64xf32>
    %4 = vector.broadcast %3 : vector<1x64xf32> to vector<64x64xf32>
    %5 = arith.addf %2, %4 : vector<64x64xf32>
    %c0_5 = arith.constant 0 : index
    %c0_6 = arith.constant 0 : index
    %6 = vector.load %arg9[%c0_5, %c0_6] : memref<64x64xf32, #tpu.memory_space<vmem>>, vector<64x64xf32>
    tpu.vector_store %arg9[%c0_5, %c0_6], %5 {strides = array<i32>} : memref<64x64xf32, #tpu.memory_space<vmem>>, vector<64x64xf32>,
    %c0_7 = arith.constant 0 : index
    %c0_8 = arith.constant 0 : index
    %7 = vector.load %arg5[%c0_7, %c0_8] : memref<8x16xf32, #tpu.memory_space<vmem>>, vector<8x16xf32>
    %c0_9 = arith.constant 0 : index
    %c0_10 = arith.constant 0 : index
    %8 = vector.load %arg10[%c0_9, %c0_10] : memref<8x16xf32, #tpu.memory_space<vmem>>, vector<8x16xf32>
    tpu.vector_store %arg10[%c0_9, %c0_10], %7 {strides = array<i32>} : memref<8x16xf32, #tpu.memory_space<vmem>>, vector<8x16xf32>,
    %c0_11 = arith.constant 0 : index
    %c0_12 = arith.constant 0 : index
    %9 = vector.load %arg6[%c0_11, %c0_12] : memref<8x16xf32, #tpu.memory_space<vmem>>, vector<8x16xf32>
    %c0_13 = arith.constant 0 : index
    %c0_14 = arith.constant 0 : index
    %10 = vector.load %arg11[%c0_13, %c0_14] : memref<8x16xf32, #tpu.memory_space<vmem>>, vector<8x16xf32>
    tpu.vector_store %arg11[%c0_13, %c0_14], %9 {strides = array<i32>} : memref<8x16xf32, #tpu.memory_space<vmem>>, vector<8x16xf32>,
    %c0_15 = arith.constant 0 : index
    %c0_16 = arith.constant 0 : index
    %11 = vector.load %arg3[%c0_15, %c0_16] : memref<16x64xf32, #tpu.memory_space<vmem>>, vector<16x64xf32>
    %c0_i32 = arith.constant 0 : i32
    %c8_i32 = arith.constant 8 : i32
    %12 = arith.muli %c0_i32, %c8_i32 : i32
    %13 = tpu.assume_multiple %12, 8 : i32
    %c0_17 = arith.constant 0 : index
    %c0_18 = arith.constant 0 : index
    %14 = vector.load %arg10[%c0_17, %c0_18] : memref<8x16xf32, #tpu.memory_space<vmem>>, vector<8x16xf32>
    %c0_19 = arith.constant 0 : index
    %c0_20 = arith.constant 0 : index
    %15 = vector.load %arg11[%c0_19, %c0_20] : memref<8x16xf32, #tpu.memory_space<vmem>>, vector<8x16xf32>
    %16 = arith.index_cast %13 : i32 to index
    %c0_21 = arith.constant 0 : index
    %17 = vector.load %arg9[%16, %c0_21] : memref<64x64xf32, #tpu.memory_space<vmem>>, vector<8x64xf32>
    %cst_22 = arith.constant dense<0.000000e+00> : vector<8x64xf32>
    %18 = tpu.matmul %14, %11, %cst_22 {dimension_numbers = #tpu.dot_dimension_numbers<[1], [0], [0], [1], [0, 0, 1, 1], [], []>} : vector<8x16xf32>, vector<16x64xf32>, vector<8x64xf32> -> vector<8x64xf32>
    %19 = arith.addf %17, %18 : vector<8x64xf32>
    %20 = arith.negf %19 : vector<8x64xf32>
    %21 = math.exp %20 : vector<8x64xf32>
    %cst_23 = arith.constant 1.000000e+00 : f32
    %22 = vector.broadcast %cst_23 : f32 to vector<8x64xf32>
    %23 = arith.addf %22, %21 : vector<8x64xf32>
    %24 = arith.divf %22, %23 : vector<8x64xf32>
    %25 = math.tanh %19 : vector<8x64xf32>
    %26 = vector.extract_strided_slice %24 {offsets = [0, 0], sizes = [8, 16], strides = [1, 1]} : vector<8x64xf32> to vector<8x16xf32>
    %27 = vector.extract_strided_slice %24 {offsets = [0, 16], sizes = [8, 16], strides = [1, 1]} : vector<8x64xf32> to vector<8x16xf32>
    %28 = vector.extract_strided_slice %25 {offsets = [0, 32], sizes = [8, 16], strides = [1, 1]} : vector<8x64xf32> to vector<8x16xf32>
    %29 = vector.extract_strided_slice %24 {offsets = [0, 48], sizes = [8, 16], strides = [1, 1]} : vector<8x64xf32> to vector<8x16xf32>
    %30 = arith.mulf %27, %15 : vector<8x16xf32>
    %31 = arith.mulf %26, %28 : vector<8x16xf32>
    %32 = arith.addf %30, %31 : vector<8x16xf32>
    %33 = math.tanh %32 : vector<8x16xf32>
    %34 = arith.mulf %29, %33 : vector<8x16xf32>
    %c0_24 = arith.constant 0 : index
    %c0_25 = arith.constant 0 : index
    %35 = vector.load %arg10[%c0_24, %c0_25] : memref<8x16xf32, #tpu.memory_space<vmem>>, vector<8x16xf32>
    tpu.vector_store %arg10[%c0_24, %c0_25], %34 {strides = array<i32>} : memref<8x16xf32, #tpu.memory_space<vmem>>, vector<8x16xf32>,
    %c0_26 = arith.constant 0 : index
    %c0_27 = arith.constant 0 : index
    %36 = vector.load %arg11[%c0_26, %c0_27] : memref<8x16xf32, #tpu.memory_space<vmem>>, vector<8x16xf32>
    tpu.vector_store %arg11[%c0_26, %c0_27], %32 {strides = array<i32>} : memref<8x16xf32, #tpu.memory_space<vmem>>, vector<8x16xf32>,
    %37 = arith.index_cast %13 : i32 to index
    %c0_28 = arith.constant 0 : index
    %38 = vector.load %arg7[%37, %c0_28] : memref<64x16xf32, #tpu.memory_space<vmem>>, vector<8x16xf32>
    tpu.vector_store %arg7[%37, %c0_28], %34 {strides = array<i32>} : memref<64x16xf32, #tpu.memory_space<vmem>>, vector<8x16xf32>,
    %c1_i32 = arith.constant 1 : i32
    %c8_i32_29 = arith.constant 8 : i32
    %39 = arith.muli %c1_i32, %c8_i32_29 : i32
    %40 = tpu.assume_multiple %39, 8 : i32
    %c0_30 = arith.constant 0 : index
    %c0_31 = arith.constant 0 : index
    %41 = vector.load %arg10[%c0_30, %c0_31] : memref<8x16xf32, #tpu.memory_space<vmem>>, vector<8x16xf32>
    %c0_32 = arith.constant 0 : index
    %c0_33 = arith.constant 0 : index
    %42 = vector.load %arg11[%c0_32, %c0_33] : memref<8x16xf32, #tpu.memory_space<vmem>>, vector<8x16xf32>
    %43 = arith.index_cast %40 : i32 to index
    %c0_34 = arith.constant 0 : index
    %44 = vector.load %arg9[%43, %c0_34] : memref<64x64xf32, #tpu.memory_space<vmem>>, vector<8x64xf32>
    %cst_35 = arith.constant dense<0.000000e+00> : vector<8x64xf32>
    %45 = tpu.matmul %41, %11, %cst_35 {dimension_numbers = #tpu.dot_dimension_numbers<[1], [0], [0], [1], [0, 0, 1, 1], [], []>} : vector<8x16xf32>, vector<16x64xf32>, vector<8x64xf32> -> vector<8x64xf32>
    %46 = arith.addf %44, %45 : vector<8x64xf32>
    %47 = arith.negf %46 : vector<8x64xf32>
    %48 = math.exp %47 : vector<8x64xf32>
    %cst_36 = arith.constant 1.000000e+00 : f32
    %49 = vector.broadcast %cst_36 : f32 to vector<8x64xf32>
    %50 = arith.addf %49, %48 : vector<8x64xf32>
    %51 = arith.divf %49, %50 : vector<8x64xf32>
    %52 = math.tanh %46 : vector<8x64xf32>
    %53 = vector.extract_strided_slice %51 {offsets = [0, 0], sizes = [8, 16], strides = [1, 1]} : vector<8x64xf32> to vector<8x16xf32>
    %54 = vector.extract_strided_slice %51 {offsets = [0, 16], sizes = [8, 16], strides = [1, 1]} : vector<8x64xf32> to vector<8x16xf32>
    %55 = vector.extract_strided_slice %52 {offsets = [0, 32], sizes = [8, 16], strides = [1, 1]} : vector<8x64xf32> to vector<8x16xf32>
    %56 = vector.extract_strided_slice %51 {offsets = [0, 48], sizes = [8, 16], strides = [1, 1]} : vector<8x64xf32> to vector<8x16xf32>
    %57 = arith.mulf %54, %42 : vector<8x16xf32>
    %58 = arith.mulf %53, %55 : vector<8x16xf32>
    %59 = arith.addf %57, %58 : vector<8x16xf32>
    %60 = math.tanh %59 : vector<8x16xf32>
    %61 = arith.mulf %56, %60 : vector<8x16xf32>
    %c0_37 = arith.constant 0 : index
    %c0_38 = arith.constant 0 : index
    %62 = vector.load %arg10[%c0_37, %c0_38] : memref<8x16xf32, #tpu.memory_space<vmem>>, vector<8x16xf32>
    tpu.vector_store %arg10[%c0_37, %c0_38], %61 {strides = array<i32>} : memref<8x16xf32, #tpu.memory_space<vmem>>, vector<8x16xf32>,
    %c0_39 = arith.constant 0 : index
    %c0_40 = arith.constant 0 : index
    %63 = vector.load %arg11[%c0_39, %c0_40] : memref<8x16xf32, #tpu.memory_space<vmem>>, vector<8x16xf32>
    tpu.vector_store %arg11[%c0_39, %c0_40], %59 {strides = array<i32>} : memref<8x16xf32, #tpu.memory_space<vmem>>, vector<8x16xf32>,
    %64 = arith.index_cast %40 : i32 to index
    %c0_41 = arith.constant 0 : index
    %65 = vector.load %arg7[%64, %c0_41] : memref<64x16xf32, #tpu.memory_space<vmem>>, vector<8x16xf32>
    tpu.vector_store %arg7[%64, %c0_41], %61 {strides = array<i32>} : memref<64x16xf32, #tpu.memory_space<vmem>>, vector<8x16xf32>,
    %c2_i32 = arith.constant 2 : i32
    %c8_i32_42 = arith.constant 8 : i32
    %66 = arith.muli %c2_i32, %c8_i32_42 : i32
    %67 = tpu.assume_multiple %66, 8 : i32
    %c0_43 = arith.constant 0 : index
    %c0_44 = arith.constant 0 : index
    %68 = vector.load %arg10[%c0_43, %c0_44] : memref<8x16xf32, #tpu.memory_space<vmem>>, vector<8x16xf32>
    %c0_45 = arith.constant 0 : index
    %c0_46 = arith.constant 0 : index
    %69 = vector.load %arg11[%c0_45, %c0_46] : memref<8x16xf32, #tpu.memory_space<vmem>>, vector<8x16xf32>
    %70 = arith.index_cast %67 : i32 to index
    %c0_47 = arith.constant 0 : index
    %71 = vector.load %arg9[%70, %c0_47] : memref<64x64xf32, #tpu.memory_space<vmem>>, vector<8x64xf32>
    %cst_48 = arith.constant dense<0.000000e+00> : vector<8x64xf32>
    %72 = tpu.matmul %68, %11, %cst_48 {dimension_numbers = #tpu.dot_dimension_numbers<[1], [0], [0], [1], [0, 0, 1, 1], [], []>} : vector<8x16xf32>, vector<16x64xf32>, vector<8x64xf32> -> vector<8x64xf32>
    %73 = arith.addf %71, %72 : vector<8x64xf32>
    %74 = arith.negf %73 : vector<8x64xf32>
    %75 = math.exp %74 : vector<8x64xf32>
    %cst_49 = arith.constant 1.000000e+00 : f32
    %76 = vector.broadcast %cst_49 : f32 to vector<8x64xf32>
    %77 = arith.addf %76, %75 : vector<8x64xf32>
    %78 = arith.divf %76, %77 : vector<8x64xf32>
    %79 = math.tanh %73 : vector<8x64xf32>
    %80 = vector.extract_strided_slice %78 {offsets = [0, 0], sizes = [8, 16], strides = [1, 1]} : vector<8x64xf32> to vector<8x16xf32>
    %81 = vector.extract_strided_slice %78 {offsets = [0, 16], sizes = [8, 16], strides = [1, 1]} : vector<8x64xf32> to vector<8x16xf32>
    %82 = vector.extract_strided_slice %79 {offsets = [0, 32], sizes = [8, 16], strides = [1, 1]} : vector<8x64xf32> to vector<8x16xf32>
    %83 = vector.extract_strided_slice %78 {offsets = [0, 48], sizes = [8, 16], strides = [1, 1]} : vector<8x64xf32> to vector<8x16xf32>
    %84 = arith.mulf %81, %69 : vector<8x16xf32>
    %85 = arith.mulf %80, %82 : vector<8x16xf32>
    %86 = arith.addf %84, %85 : vector<8x16xf32>
    %87 = math.tanh %86 : vector<8x16xf32>
    %88 = arith.mulf %83, %87 : vector<8x16xf32>
    %c0_50 = arith.constant 0 : index
    %c0_51 = arith.constant 0 : index
    %89 = vector.load %arg10[%c0_50, %c0_51] : memref<8x16xf32, #tpu.memory_space<vmem>>, vector<8x16xf32>
    tpu.vector_store %arg10[%c0_50, %c0_51], %88 {strides = array<i32>} : memref<8x16xf32, #tpu.memory_space<vmem>>, vector<8x16xf32>,
    %c0_52 = arith.constant 0 : index
    %c0_53 = arith.constant 0 : index
    %90 = vector.load %arg11[%c0_52, %c0_53] : memref<8x16xf32, #tpu.memory_space<vmem>>, vector<8x16xf32>
    tpu.vector_store %arg11[%c0_52, %c0_53], %86 {strides = array<i32>} : memref<8x16xf32, #tpu.memory_space<vmem>>, vector<8x16xf32>,
    %91 = arith.index_cast %67 : i32 to index
    %c0_54 = arith.constant 0 : index
    %92 = vector.load %arg7[%91, %c0_54] : memref<64x16xf32, #tpu.memory_space<vmem>>, vector<8x16xf32>
    tpu.vector_store %arg7[%91, %c0_54], %88 {strides = array<i32>} : memref<64x16xf32, #tpu.memory_space<vmem>>, vector<8x16xf32>,
    %c3_i32 = arith.constant 3 : i32
    %c8_i32_55 = arith.constant 8 : i32
    %93 = arith.muli %c3_i32, %c8_i32_55 : i32
    %94 = tpu.assume_multiple %93, 8 : i32
    %c0_56 = arith.constant 0 : index
    %c0_57 = arith.constant 0 : index
    %95 = vector.load %arg10[%c0_56, %c0_57] : memref<8x16xf32, #tpu.memory_space<vmem>>, vector<8x16xf32>
    %c0_58 = arith.constant 0 : index
    %c0_59 = arith.constant 0 : index
    %96 = vector.load %arg11[%c0_58, %c0_59] : memref<8x16xf32, #tpu.memory_space<vmem>>, vector<8x16xf32>
    %97 = arith.index_cast %94 : i32 to index
    %c0_60 = arith.constant 0 : index
    %98 = vector.load %arg9[%97, %c0_60] : memref<64x64xf32, #tpu.memory_space<vmem>>, vector<8x64xf32>
    %cst_61 = arith.constant dense<0.000000e+00> : vector<8x64xf32>
    %99 = tpu.matmul %95, %11, %cst_61 {dimension_numbers = #tpu.dot_dimension_numbers<[1], [0], [0], [1], [0, 0, 1, 1], [], []>} : vector<8x16xf32>, vector<16x64xf32>, vector<8x64xf32> -> vector<8x64xf32>
    %100 = arith.addf %98, %99 : vector<8x64xf32>
    %101 = arith.negf %100 : vector<8x64xf32>
    %102 = math.exp %101 : vector<8x64xf32>
    %cst_62 = arith.constant 1.000000e+00 : f32
    %103 = vector.broadcast %cst_62 : f32 to vector<8x64xf32>
    %104 = arith.addf %103, %102 : vector<8x64xf32>
    %105 = arith.divf %103, %104 : vector<8x64xf32>
    %106 = math.tanh %100 : vector<8x64xf32>
    %107 = vector.extract_strided_slice %105 {offsets = [0, 0], sizes = [8, 16], strides = [1, 1]} : vector<8x64xf32> to vector<8x16xf32>
    %108 = vector.extract_strided_slice %105 {offsets = [0, 16], sizes = [8, 16], strides = [1, 1]} : vector<8x64xf32> to vector<8x16xf32>
    %109 = vector.extract_strided_slice %106 {offsets = [0, 32], sizes = [8, 16], strides = [1, 1]} : vector<8x64xf32> to vector<8x16xf32>
    %110 = vector.extract_strided_slice %105 {offsets = [0, 48], sizes = [8, 16], strides = [1, 1]} : vector<8x64xf32> to vector<8x16xf32>
    %111 = arith.mulf %108, %96 : vector<8x16xf32>
    %112 = arith.mulf %107, %109 : vector<8x16xf32>
    %113 = arith.addf %111, %112 : vector<8x16xf32>
    %114 = math.tanh %113 : vector<8x16xf32>
    %115 = arith.mulf %110, %114 : vector<8x16xf32>
    %c0_63 = arith.constant 0 : index
    %c0_64 = arith.constant 0 : index
    %116 = vector.load %arg10[%c0_63, %c0_64] : memref<8x16xf32, #tpu.memory_space<vmem>>, vector<8x16xf32>
    tpu.vector_store %arg10[%c0_63, %c0_64], %115 {strides = array<i32>} : memref<8x16xf32, #tpu.memory_space<vmem>>, vector<8x16xf32>,
    %c0_65 = arith.constant 0 : index
    %c0_66 = arith.constant 0 : index
    %117 = vector.load %arg11[%c0_65, %c0_66] : memref<8x16xf32, #tpu.memory_space<vmem>>, vector<8x16xf32>
    tpu.vector_store %arg11[%c0_65, %c0_66], %113 {strides = array<i32>} : memref<8x16xf32, #tpu.memory_space<vmem>>, vector<8x16xf32>,
    %118 = arith.index_cast %94 : i32 to index
    %c0_67 = arith.constant 0 : index
    %119 = vector.load %arg7[%118, %c0_67] : memref<64x16xf32, #tpu.memory_space<vmem>>, vector<8x16xf32>
    tpu.vector_store %arg7[%118, %c0_67], %115 {strides = array<i32>} : memref<64x16xf32, #tpu.memory_space<vmem>>, vector<8x16xf32>,
    %c4_i32 = arith.constant 4 : i32
    %c8_i32_68 = arith.constant 8 : i32
    %120 = arith.muli %c4_i32, %c8_i32_68 : i32
    %121 = tpu.assume_multiple %120, 8 : i32
    %c0_69 = arith.constant 0 : index
    %c0_70 = arith.constant 0 : index
    %122 = vector.load %arg10[%c0_69, %c0_70] : memref<8x16xf32, #tpu.memory_space<vmem>>, vector<8x16xf32>
    %c0_71 = arith.constant 0 : index
    %c0_72 = arith.constant 0 : index
    %123 = vector.load %arg11[%c0_71, %c0_72] : memref<8x16xf32, #tpu.memory_space<vmem>>, vector<8x16xf32>
    %124 = arith.index_cast %121 : i32 to index
    %c0_73 = arith.constant 0 : index
    %125 = vector.load %arg9[%124, %c0_73] : memref<64x64xf32, #tpu.memory_space<vmem>>, vector<8x64xf32>
    %cst_74 = arith.constant dense<0.000000e+00> : vector<8x64xf32>
    %126 = tpu.matmul %122, %11, %cst_74 {dimension_numbers = #tpu.dot_dimension_numbers<[1], [0], [0], [1], [0, 0, 1, 1], [], []>} : vector<8x16xf32>, vector<16x64xf32>, vector<8x64xf32> -> vector<8x64xf32>
    %127 = arith.addf %125, %126 : vector<8x64xf32>
    %128 = arith.negf %127 : vector<8x64xf32>
    %129 = math.exp %128 : vector<8x64xf32>
    %cst_75 = arith.constant 1.000000e+00 : f32
    %130 = vector.broadcast %cst_75 : f32 to vector<8x64xf32>
    %131 = arith.addf %130, %129 : vector<8x64xf32>
    %132 = arith.divf %130, %131 : vector<8x64xf32>
    %133 = math.tanh %127 : vector<8x64xf32>
    %134 = vector.extract_strided_slice %132 {offsets = [0, 0], sizes = [8, 16], strides = [1, 1]} : vector<8x64xf32> to vector<8x16xf32>
    %135 = vector.extract_strided_slice %132 {offsets = [0, 16], sizes = [8, 16], strides = [1, 1]} : vector<8x64xf32> to vector<8x16xf32>
    %136 = vector.extract_strided_slice %133 {offsets = [0, 32], sizes = [8, 16], strides = [1, 1]} : vector<8x64xf32> to vector<8x16xf32>
    %137 = vector.extract_strided_slice %132 {offsets = [0, 48], sizes = [8, 16], strides = [1, 1]} : vector<8x64xf32> to vector<8x16xf32>
    %138 = arith.mulf %135, %123 : vector<8x16xf32>
    %139 = arith.mulf %134, %136 : vector<8x16xf32>
    %140 = arith.addf %138, %139 : vector<8x16xf32>
    %141 = math.tanh %140 : vector<8x16xf32>
    %142 = arith.mulf %137, %141 : vector<8x16xf32>
    %c0_76 = arith.constant 0 : index
    %c0_77 = arith.constant 0 : index
    %143 = vector.load %arg10[%c0_76, %c0_77] : memref<8x16xf32, #tpu.memory_space<vmem>>, vector<8x16xf32>
    tpu.vector_store %arg10[%c0_76, %c0_77], %142 {strides = array<i32>} : memref<8x16xf32, #tpu.memory_space<vmem>>, vector<8x16xf32>,
    %c0_78 = arith.constant 0 : index
    %c0_79 = arith.constant 0 : index
    %144 = vector.load %arg11[%c0_78, %c0_79] : memref<8x16xf32, #tpu.memory_space<vmem>>, vector<8x16xf32>
    tpu.vector_store %arg11[%c0_78, %c0_79], %140 {strides = array<i32>} : memref<8x16xf32, #tpu.memory_space<vmem>>, vector<8x16xf32>,
    %145 = arith.index_cast %121 : i32 to index
    %c0_80 = arith.constant 0 : index
    %146 = vector.load %arg7[%145, %c0_80] : memref<64x16xf32, #tpu.memory_space<vmem>>, vector<8x16xf32>
    tpu.vector_store %arg7[%145, %c0_80], %142 {strides = array<i32>} : memref<64x16xf32, #tpu.memory_space<vmem>>, vector<8x16xf32>,
    %c5_i32 = arith.constant 5 : i32
    %c8_i32_81 = arith.constant 8 : i32
    %147 = arith.muli %c5_i32, %c8_i32_81 : i32
    %148 = tpu.assume_multiple %147, 8 : i32
    %c0_82 = arith.constant 0 : index
    %c0_83 = arith.constant 0 : index
    %149 = vector.load %arg10[%c0_82, %c0_83] : memref<8x16xf32, #tpu.memory_space<vmem>>, vector<8x16xf32>
    %c0_84 = arith.constant 0 : index
    %c0_85 = arith.constant 0 : index
    %150 = vector.load %arg11[%c0_84, %c0_85] : memref<8x16xf32, #tpu.memory_space<vmem>>, vector<8x16xf32>
    %151 = arith.index_cast %148 : i32 to index
    %c0_86 = arith.constant 0 : index
    %152 = vector.load %arg9[%151, %c0_86] : memref<64x64xf32, #tpu.memory_space<vmem>>, vector<8x64xf32>
    %cst_87 = arith.constant dense<0.000000e+00> : vector<8x64xf32>
    %153 = tpu.matmul %149, %11, %cst_87 {dimension_numbers = #tpu.dot_dimension_numbers<[1], [0], [0], [1], [0, 0, 1, 1], [], []>} : vector<8x16xf32>, vector<16x64xf32>, vector<8x64xf32> -> vector<8x64xf32>
    %154 = arith.addf %152, %153 : vector<8x64xf32>
    %155 = arith.negf %154 : vector<8x64xf32>
    %156 = math.exp %155 : vector<8x64xf32>
    %cst_88 = arith.constant 1.000000e+00 : f32
    %157 = vector.broadcast %cst_88 : f32 to vector<8x64xf32>
    %158 = arith.addf %157, %156 : vector<8x64xf32>
    %159 = arith.divf %157, %158 : vector<8x64xf32>
    %160 = math.tanh %154 : vector<8x64xf32>
    %161 = vector.extract_strided_slice %159 {offsets = [0, 0], sizes = [8, 16], strides = [1, 1]} : vector<8x64xf32> to vector<8x16xf32>
    %162 = vector.extract_strided_slice %159 {offsets = [0, 16], sizes = [8, 16], strides = [1, 1]} : vector<8x64xf32> to vector<8x16xf32>
    %163 = vector.extract_strided_slice %160 {offsets = [0, 32], sizes = [8, 16], strides = [1, 1]} : vector<8x64xf32> to vector<8x16xf32>
    %164 = vector.extract_strided_slice %159 {offsets = [0, 48], sizes = [8, 16], strides = [1, 1]} : vector<8x64xf32> to vector<8x16xf32>
    %165 = arith.mulf %162, %150 : vector<8x16xf32>
    %166 = arith.mulf %161, %163 : vector<8x16xf32>
    %167 = arith.addf %165, %166 : vector<8x16xf32>
    %168 = math.tanh %167 : vector<8x16xf32>
    %169 = arith.mulf %164, %168 : vector<8x16xf32>
    %c0_89 = arith.constant 0 : index
    %c0_90 = arith.constant 0 : index
    %170 = vector.load %arg10[%c0_89, %c0_90] : memref<8x16xf32, #tpu.memory_space<vmem>>, vector<8x16xf32>
    tpu.vector_store %arg10[%c0_89, %c0_90], %169 {strides = array<i32>} : memref<8x16xf32, #tpu.memory_space<vmem>>, vector<8x16xf32>,
    %c0_91 = arith.constant 0 : index
    %c0_92 = arith.constant 0 : index
    %171 = vector.load %arg11[%c0_91, %c0_92] : memref<8x16xf32, #tpu.memory_space<vmem>>, vector<8x16xf32>
    tpu.vector_store %arg11[%c0_91, %c0_92], %167 {strides = array<i32>} : memref<8x16xf32, #tpu.memory_space<vmem>>, vector<8x16xf32>,
    %172 = arith.index_cast %148 : i32 to index
    %c0_93 = arith.constant 0 : index
    %173 = vector.load %arg7[%172, %c0_93] : memref<64x16xf32, #tpu.memory_space<vmem>>, vector<8x16xf32>
    tpu.vector_store %arg7[%172, %c0_93], %169 {strides = array<i32>} : memref<64x16xf32, #tpu.memory_space<vmem>>, vector<8x16xf32>,
    %c6_i32 = arith.constant 6 : i32
    %c8_i32_94 = arith.constant 8 : i32
    %174 = arith.muli %c6_i32, %c8_i32_94 : i32
    %175 = tpu.assume_multiple %174, 8 : i32
    %c0_95 = arith.constant 0 : index
    %c0_96 = arith.constant 0 : index
    %176 = vector.load %arg10[%c0_95, %c0_96] : memref<8x16xf32, #tpu.memory_space<vmem>>, vector<8x16xf32>
    %c0_97 = arith.constant 0 : index
    %c0_98 = arith.constant 0 : index
    %177 = vector.load %arg11[%c0_97, %c0_98] : memref<8x16xf32, #tpu.memory_space<vmem>>, vector<8x16xf32>
    %178 = arith.index_cast %175 : i32 to index
    %c0_99 = arith.constant 0 : index
    %179 = vector.load %arg9[%178, %c0_99] : memref<64x64xf32, #tpu.memory_space<vmem>>, vector<8x64xf32>
    %cst_100 = arith.constant dense<0.000000e+00> : vector<8x64xf32>
    %180 = tpu.matmul %176, %11, %cst_100 {dimension_numbers = #tpu.dot_dimension_numbers<[1], [0], [0], [1], [0, 0, 1, 1], [], []>} : vector<8x16xf32>, vector<16x64xf32>, vector<8x64xf32> -> vector<8x64xf32>
    %181 = arith.addf %179, %180 : vector<8x64xf32>
    %182 = arith.negf %181 : vector<8x64xf32>
    %183 = math.exp %182 : vector<8x64xf32>
    %cst_101 = arith.constant 1.000000e+00 : f32
    %184 = vector.broadcast %cst_101 : f32 to vector<8x64xf32>
    %185 = arith.addf %184, %183 : vector<8x64xf32>
    %186 = arith.divf %184, %185 : vector<8x64xf32>
    %187 = math.tanh %181 : vector<8x64xf32>
    %188 = vector.extract_strided_slice %186 {offsets = [0, 0], sizes = [8, 16], strides = [1, 1]} : vector<8x64xf32> to vector<8x16xf32>
    %189 = vector.extract_strided_slice %186 {offsets = [0, 16], sizes = [8, 16], strides = [1, 1]} : vector<8x64xf32> to vector<8x16xf32>
    %190 = vector.extract_strided_slice %187 {offsets = [0, 32], sizes = [8, 16], strides = [1, 1]} : vector<8x64xf32> to vector<8x16xf32>
    %191 = vector.extract_strided_slice %186 {offsets = [0, 48], sizes = [8, 16], strides = [1, 1]} : vector<8x64xf32> to vector<8x16xf32>
    %192 = arith.mulf %189, %177 : vector<8x16xf32>
    %193 = arith.mulf %188, %190 : vector<8x16xf32>
    %194 = arith.addf %192, %193 : vector<8x16xf32>
    %195 = math.tanh %194 : vector<8x16xf32>
    %196 = arith.mulf %191, %195 : vector<8x16xf32>
    %c0_102 = arith.constant 0 : index
    %c0_103 = arith.constant 0 : index
    %197 = vector.load %arg10[%c0_102, %c0_103] : memref<8x16xf32, #tpu.memory_space<vmem>>, vector<8x16xf32>
    tpu.vector_store %arg10[%c0_102, %c0_103], %196 {strides = array<i32>} : memref<8x16xf32, #tpu.memory_space<vmem>>, vector<8x16xf32>,
    %c0_104 = arith.constant 0 : index
    %c0_105 = arith.constant 0 : index
    %198 = vector.load %arg11[%c0_104, %c0_105] : memref<8x16xf32, #tpu.memory_space<vmem>>, vector<8x16xf32>
    tpu.vector_store %arg11[%c0_104, %c0_105], %194 {strides = array<i32>} : memref<8x16xf32, #tpu.memory_space<vmem>>, vector<8x16xf32>,
    %199 = arith.index_cast %175 : i32 to index
    %c0_106 = arith.constant 0 : index
    %200 = vector.load %arg7[%199, %c0_106] : memref<64x16xf32, #tpu.memory_space<vmem>>, vector<8x16xf32>
    tpu.vector_store %arg7[%199, %c0_106], %196 {strides = array<i32>} : memref<64x16xf32, #tpu.memory_space<vmem>>, vector<8x16xf32>,
    %c7_i32 = arith.constant 7 : i32
    %c8_i32_107 = arith.constant 8 : i32
    %201 = arith.muli %c7_i32, %c8_i32_107 : i32
    %202 = tpu.assume_multiple %201, 8 : i32
    %c0_108 = arith.constant 0 : index
    %c0_109 = arith.constant 0 : index
    %203 = vector.load %arg10[%c0_108, %c0_109] : memref<8x16xf32, #tpu.memory_space<vmem>>, vector<8x16xf32>
    %c0_110 = arith.constant 0 : index
    %c0_111 = arith.constant 0 : index
    %204 = vector.load %arg11[%c0_110, %c0_111] : memref<8x16xf32, #tpu.memory_space<vmem>>, vector<8x16xf32>
    %205 = arith.index_cast %202 : i32 to index
    %c0_112 = arith.constant 0 : index
    %206 = vector.load %arg9[%205, %c0_112] : memref<64x64xf32, #tpu.memory_space<vmem>>, vector<8x64xf32>
    %cst_113 = arith.constant dense<0.000000e+00> : vector<8x64xf32>
    %207 = tpu.matmul %203, %11, %cst_113 {dimension_numbers = #tpu.dot_dimension_numbers<[1], [0], [0], [1], [0, 0, 1, 1], [], []>} : vector<8x16xf32>, vector<16x64xf32>, vector<8x64xf32> -> vector<8x64xf32>
    %208 = arith.addf %206, %207 : vector<8x64xf32>
    %209 = arith.negf %208 : vector<8x64xf32>
    %210 = math.exp %209 : vector<8x64xf32>
    %cst_114 = arith.constant 1.000000e+00 : f32
    %211 = vector.broadcast %cst_114 : f32 to vector<8x64xf32>
    %212 = arith.addf %211, %210 : vector<8x64xf32>
    %213 = arith.divf %211, %212 : vector<8x64xf32>
    %214 = math.tanh %208 : vector<8x64xf32>
    %215 = vector.extract_strided_slice %213 {offsets = [0, 0], sizes = [8, 16], strides = [1, 1]} : vector<8x64xf32> to vector<8x16xf32>
    %216 = vector.extract_strided_slice %213 {offsets = [0, 16], sizes = [8, 16], strides = [1, 1]} : vector<8x64xf32> to vector<8x16xf32>
    %217 = vector.extract_strided_slice %214 {offsets = [0, 32], sizes = [8, 16], strides = [1, 1]} : vector<8x64xf32> to vector<8x16xf32>
    %218 = vector.extract_strided_slice %213 {offsets = [0, 48], sizes = [8, 16], strides = [1, 1]} : vector<8x64xf32> to vector<8x16xf32>
    %219 = arith.mulf %216, %204 : vector<8x16xf32>
    %220 = arith.mulf %215, %217 : vector<8x16xf32>
    %221 = arith.addf %219, %220 : vector<8x16xf32>
    %222 = math.tanh %221 : vector<8x16xf32>
    %223 = arith.mulf %218, %222 : vector<8x16xf32>
    %c0_115 = arith.constant 0 : index
    %c0_116 = arith.constant 0 : index
    %224 = vector.load %arg10[%c0_115, %c0_116] : memref<8x16xf32, #tpu.memory_space<vmem>>, vector<8x16xf32>
    tpu.vector_store %arg10[%c0_115, %c0_116], %223 {strides = array<i32>} : memref<8x16xf32, #tpu.memory_space<vmem>>, vector<8x16xf32>,
    %c0_117 = arith.constant 0 : index
    %c0_118 = arith.constant 0 : index
    %225 = vector.load %arg11[%c0_117, %c0_118] : memref<8x16xf32, #tpu.memory_space<vmem>>, vector<8x16xf32>
    tpu.vector_store %arg11[%c0_117, %c0_118], %221 {strides = array<i32>} : memref<8x16xf32, #tpu.memory_space<vmem>>, vector<8x16xf32>,
    %226 = arith.index_cast %202 : i32 to index
    %c0_119 = arith.constant 0 : index
    %227 = vector.load %arg7[%226, %c0_119] : memref<64x16xf32, #tpu.memory_space<vmem>>, vector<8x16xf32>
    tpu.vector_store %arg7[%226, %c0_119], %223 {strides = array<i32>} : memref<64x16xf32, #tpu.memory_space<vmem>>, vector<8x16xf32>,
    %c8_i32_120 = arith.constant 8 : i32
    %c0_121 = arith.constant 0 : index
    %c0_122 = arith.constant 0 : index
    %228 = vector.load %arg11[%c0_121, %c0_122] : memref<8x16xf32, #tpu.memory_space<vmem>>, vector<8x16xf32>
    %c0_123 = arith.constant 0 : index
    %c0_124 = arith.constant 0 : index
    %229 = vector.load %arg8[%c0_123, %c0_124] : memref<8x16xf32, #tpu.memory_space<vmem>>, vector<8x16xf32>
    tpu.vector_store %arg8[%c0_123, %c0_124], %228 {strides = array<i32>} : memref<8x16xf32, #tpu.memory_space<vmem>>, vector<8x16xf32>,
    return
  }
  func.func @transform_0(%arg0: i32) -> (i32, i32) {
    %c0_i32 = arith.constant 0 : i32
    %c0_i32_0 = arith.constant 0 : i32
    %c0_i32_1 = arith.constant 0 : i32
    return %c0_i32, %c0_i32_0 : i32, i32
  }
  func.func @transform_1(%arg0: i32) -> (i32, i32) {
    %c0_i32 = arith.constant 0 : i32
    %c0_i32_0 = arith.constant 0 : i32
    %c0_i32_1 = arith.constant 0 : i32
    return %c0_i32, %c0_i32_0 : i32, i32
  }
  func.func @transform_2(%arg0: i32) -> (i32, i32) {
    %c0_i32 = arith.constant 0 : i32
    %c0_i32_0 = arith.constant 0 : i32
    %c0_i32_1 = arith.constant 0 : i32
    return %c0_i32, %c0_i32_0 : i32, i32
  }
  func.func @transform_3(%arg0: i32) -> (i32, i32) {
    %c0_i32 = arith.constant 0 : i32
    %c0_i32_0 = arith.constant 0 : i32
    %c0_i32_1 = arith.constant 0 : i32
    return %c0_i32, %c0_i32_0 : i32, i32
  }
  func.func @transform_4(%arg0: i32) -> (i32, i32) {
    %c0_i32 = arith.constant 0 : i32
    %c0_i32_0 = arith.constant 0 : i32
    %c0_i32_1 = arith.constant 0 : i32
    return %c0_i32, %c0_i32_0 : i32, i32
  }
  func.func @transform_5(%arg0: i32) -> (i32, i32) {
    %c0_i32 = arith.constant 0 : i32
    %c0_i32_0 = arith.constant 0 : i32
    %c0_i32_1 = arith.constant 0 : i32
    return %c0_i32, %c0_i32_0 : i32, i32
  }
  func.func @transform_6(%arg0: i32) -> (i32, i32) {
    %c0_i32 = arith.constant 0 : i32
    %c0_i32_0 = arith.constant 0 : i32
    %c0_i32_1 = arith.constant 0 : i32
    return %c0_i32, %c0_i32_0 : i32, i32
  }
  func.func @transform_7(%arg0: i32) -> (i32, i32) {
    %c0_i32 = arith.constant 0 : i32
    %c0_i32_0 = arith.constant 0 : i32
    %c0_i32_1 = arith.constant 0 : i32
    return %c0_i32, %c0_i32_0 : i32, i32
  }
}

</mosaic_0001>

<llo_original>
// kernel: lmrnn_forward.1
$region0: #{lmrnn_forward.1}
  #allocation0 [shape = 'u32[]', space=smem, size = 0x4, offset = 0x4, fixed_abs, tag = 'smem constant byte address 0x4 - core index']
  #allocation1 [shape = 'u32[144,128]{1,0:T(1,128)}', space=vmem, size = 0x12000, scoped, tag = 'internal scratch']
  #allocation2 [shape = 'f32[64,64]{1,0:T(8,128)}', space=vmem, size = 0x8000, scoped, tag = 'scratch operand']
  #allocation3 [shape = 'f32[8,16]{1,0:T(8,128)}', space=vmem, size = 0x1000, scoped, tag = 'scratch operand']
  #allocation4 [shape = 'f32[8,16]{1,0:T(8,128)}', space=vmem, size = 0x1000, scoped, tag = 'scratch operand']
  %s0 = inlined_call_operand.vmem [shape: f32[64,32], index: 0, kind: input, shape index: {}]
  %s1 = inlined_call_operand.vmem [shape: f32[32,64], index: 1, kind: input, shape index: {}]
  %s2 = inlined_call_operand.vmem [shape: f32[16,64], index: 2, kind: input, shape index: {}]
  %s3 = inlined_call_operand.vmem [shape: f32[1,64], index: 3, kind: input, shape index: {}]
  %s4 = inlined_call_operand.vmem [shape: f32[8,16], index: 4, kind: input, shape index: {}, may-alias: {4,5}]
  %s5 = inlined_call_operand.vmem [shape: f32[8,16], index: 5, kind: input, shape index: {}, may-alias: {4,5}]
  %s6 = inlined_call_operand.vmem [shape: f32[64,16], index: 6, kind: output, shape index: {0}]
  %s7 = inlined_call_operand.vmem [shape: f32[8,16], index: 7, kind: output, shape index: {1}]
  %8 = xla_tuple %s6, %s7
  %s9 = sld [smem:[#allocation0]]
  $region42: #{lmrnn_forward.1} parent=0
    _
  %s11 = ssub.s32 1, %s9
  %s12 = scalar_select 0, %s11, %s9
  // Predicated region
  $region2: #{lmrnn_forward.1} parent=0 // pred_check
    _
  $region3: #{lmrnn_forward.1} parent=0 // pred_check_branch
    %14 = sbr.rel (0) target = $region5
  $region4: #{lmrnn_forward.1} parent=0 // pred_region
    _
  $region5: #{lmrnn_forward.1} parent=0 // pred_fallthru
    _
  // Predicated region
  $region6: #{lmrnn_forward.1} parent=0 // pred_check
    _
  $region7: #{lmrnn_forward.1} parent=0 // pred_check_branch
    %16 = sbr.rel (0) target = $region9
  $region8: #{lmrnn_forward.1} parent=0 // pred_region
    _
  $region9: #{lmrnn_forward.1} parent=0 // pred_fallthru
    _
  // Predicated region
  $region10: #{lmrnn_forward.1} parent=0 // pred_check
    _
  $region11: #{lmrnn_forward.1} parent=0 // pred_check_branch
    %18 = sbr.rel (0) target = $region13
  $region12: #{lmrnn_forward.1} parent=0 // pred_region
    _
  $region13: #{lmrnn_forward.1} parent=0 // pred_fallthru
    _
  // Predicated region
  $region14: #{lmrnn_forward.1} parent=0 // pred_check
    _
  $region15: #{lmrnn_forward.1} parent=0 // pred_check_branch
    %20 = sbr.rel (0) target = $region17
  $region16: #{lmrnn_forward.1} parent=0 // pred_region
    _
  $region17: #{lmrnn_forward.1} parent=0 // pred_fallthru
    _
  // Predicated region
  $region18: #{lmrnn_forward.1} parent=0 // pred_check
    _
  $region19: #{lmrnn_forward.1} parent=0 // pred_check_branch
    %22 = sbr.rel (0) target = $region21
  $region20: #{lmrnn_forward.1} parent=0 // pred_region
    _
  $region21: #{lmrnn_forward.1} parent=0 // pred_fallthru
    _
  // Predicated region
  $region22: #{lmrnn_forward.1} parent=0 // pred_check
    _
  $region23: #{lmrnn_forward.1} parent=0 // pred_check_branch
    %24 = sbr.rel (0) target = $region25
  $region24: #{lmrnn_forward.1} parent=0 // pred_region
    _
  $region25: #{lmrnn_forward.1} parent=0 // pred_fallthru
    _
  %v25 = vld [vmem:[%s0] sm:$0xff]
  %v26 = vld [vmem:[%s0 + $0x8] sm:$0xff]
  %v27 = vld [vmem:[%s0 + $0x10] sm:$0xff]
  %v28 = vld [vmem:[%s0 + $0x18] sm:$0xff]
  %v29 = vld [vmem:[%s0 + $0x20] sm:$0xff]
  %v30 = vld [vmem:[%s0 + $0x28] sm:$0xff]
  %v31 = vld [vmem:[%s0 + $0x30] sm:$0xff]
  %v32 = vld [vmem:[%s0 + $0x38] sm:$0xff]
  %v33 = vld [vmem:[%s1] sm:$0xff]
  %v34 = vld [vmem:[%s1 + $0x8] sm:$0xff]
  %v35 = vld [vmem:[%s1 + $0x10] sm:$0xff]
  %v36 = vld [vmem:[%s1 + $0x18] sm:$0xff]
  %v37 = vld [vmem:[%s3] sm:$0x1]
  %v39 = vlaneseq
  %v40 = vshrl.u32 %v39, 7
  %v41 = vsub.s32 0, %v40
  %v42 = vrot.slane %v37, %v41
  %vm44 = vcmask 261120
  %v46 = vsel %vm44, %v25, 0
  %v49 = vsel %vm44, %v26, 0
  %v52 = vsel %vm44, %v27, 0
  %v55 = vsel %vm44, %v28, 0
  %v58 = vsel %vm44, %v29, 0
  %v61 = vsel %vm44, %v30, 0
  %v64 = vsel %vm44, %v31, 0
  %v67 = vsel %vm44, %v32, 0
  %69 = vmatprep.subr.mxu0 0.0
  %70 = vmatpush1.msra.mxu0 %v33
  %71 = vmatprep.subr.mxu0 0.0
  %72 = vmatpush1.msra.mxu0 %v34
  %73 = vmatprep.subr.mxu0 0.0
  %74 = vmatpush1.msra.mxu0 %v35
  %75 = vmatprep.subr.mxu0 0.0
  %76 = vmatpush1.msra.mxu0 %v36
  %77 = vmatprep.subr.mxu0 0.0
  %78 = vmatpush1.msra.mxu0 0.0
  %79 = vmatprep.subr.mxu0 0.0
  %80 = vmatpush1.msra.mxu0 0.0
  %81 = vmatprep.subr.mxu0 0.0
  %82 = vmatpush1.msra.mxu0 0.0
  %83 = vmatprep.subr.mxu0 0.0
  %84 = vmatpush1.msra.mxu0 0.0
  %85 = vmatprep.subr.mxu0 0.0
  %86 = vmatpush1.msra.mxu0 0.0
  %87 = vmatprep.subr.mxu0 0.0
  %88 = vmatpush1.msra.mxu0 0.0
  %89 = vmatprep.subr.mxu0 0.0
  %90 = vmatpush1.msra.mxu0 0.0
  %91 = vmatprep.subr.mxu0 0.0
  %92 = vmatpush1.msra.mxu0 0.0
  %93 = vmatprep.subr.mxu0 0.0
  %94 = vmatpush1.msra.mxu0 0.0
  %95 = vmatprep.subr.mxu0 0.0
  %96 = vmatpush1.msra.mxu0 0.0
  %97 = vmatprep.subr.mxu0 0.0
  %98 = vmatpush1.msra.mxu0 0.0
  %99 = vmatprep.subr.mxu0 0.0
  %100 = vmatpush1.msra.mxu0 0.0
  %101 = vmatprep.subr.mxu0 0.0
  %102 = vmatpush1.msra.mxu0 0.0
  %103 = vmatprep.subr.mxu0 0.0
  %104 = vmatpush1.msra.mxu0 0.0
  %105 = vmatprep.subr.mxu0 0.0
  %106 = vmatpush1.msra.mxu0 0.0
  %107 = vmatprep.subr.mxu0 0.0
  %108 = vmatpush1.msra.mxu0 0.0
  %109 = vmatprep.subr.mxu0 0.0
  %110 = vmatpush1.msra.mxu0 0.0
  %111 = vmatprep.subr.mxu0 0.0
  %112 = vmatpush1.msra.mxu0 0.0
  %113 = vmatprep.subr.mxu0 0.0
  %114 = vmatpush1.msra.mxu0 0.0
  %115 = vmatprep.subr.mxu0 0.0
  %116 = vmatpush1.msra.mxu0 0.0
  %117 = vmatprep.subr.mxu0 0.0
  %118 = vmatpush1.msra.mxu0 0.0
  %119 = vmatprep.subr.mxu0 0.0
  %120 = vmatpush1.msra.mxu0 0.0
  %121 = vmatprep.subr.mxu0 0.0
  %122 = vmatpush1.msra.mxu0 0.0
  %123 = vmatprep.subr.mxu0 0.0
  %124 = vmatpush1.msra.mxu0 0.0
  %125 = vmatprep.subr.mxu0 0.0
  %126 = vmatpush1.msra.mxu0 0.0
  %127 = vmatprep.subr.mxu0 0.0
  %128 = vmatpush1.msra.mxu0 0.0
  %129 = vmatprep.subr.mxu0 0.0
  %130 = vmatpush1.msra.mxu0 0.0
  %131 = vmatprep.subr.mxu0 0.0
  %132 = vmatpush1.msra.mxu0 0.0
  %133 = vmatprep.mubr.f32.mxu0 0.0
  %134 = vmatmul.mubr.f32.gmra.mrb[0].mxu0 %v46
  %v135 = vpop.f32.mrb[0].mxu0
  %v136 = vadd.f32 %v42, %v135
  %v137 = vpop.f32.mrb[0].mxu0
  %138 = vmatprep.mubr.f32.mxu0 0.0
  %139 = vmatmul.mubr.f32.gmra.mrb[0].mxu0 %v49
  %v140 = vpop.f32.mrb[0].mxu0
  %v141 = vadd.f32 %v42, %v140
  %v142 = vpop.f32.mrb[0].mxu0
  %143 = vmatprep.mubr.f32.mxu0 0.0
  %144 = vmatmul.mubr.f32.gmra.mrb[0].mxu0 %v52
  %v145 = vpop.f32.mrb[0].mxu0
  %v146 = vadd.f32 %v42, %v145
  %v147 = vpop.f32.mrb[0].mxu0
  %148 = vmatprep.mubr.f32.mxu0 0.0
  %149 = vmatmul.mubr.f32.gmra.mrb[0].mxu0 %v55
  %v150 = vpop.f32.mrb[0].mxu0
  %v151 = vadd.f32 %v42, %v150
  %v152 = vpop.f32.mrb[0].mxu0
  %153 = vmatprep.mubr.f32.mxu0 0.0
  %154 = vmatmul.mubr.f32.gmra.mrb[0].mxu0 %v58
  %v155 = vpop.f32.mrb[0].mxu0
  %v156 = vadd.f32 %v42, %v155
  %v157 = vpop.f32.mrb[0].mxu0
  %158 = vmatprep.mubr.f32.mxu0 0.0
  %159 = vmatmul.mubr.f32.gmra.mrb[0].mxu0 %v61
  %v160 = vpop.f32.mrb[0].mxu0
  %v161 = vadd.f32 %v42, %v160
  %v162 = vpop.f32.mrb[0].mxu0
  %163 = vmatprep.mubr.f32.mxu0 0.0
  %164 = vmatmul.mubr.f32.gmra.mrb[0].mxu0 %v64
  %v165 = vpop.f32.mrb[0].mxu0
  %v166 = vadd.f32 %v42, %v165
  %v167 = vpop.f32.mrb[0].mxu0
  %168 = vmatprep.mubr.f32.mxu0 0.0
  %169 = vmatmul.mubr.f32.gmra.mrb[0].mxu0 %v67
  %v170 = vpop.f32.mrb[0].mxu0
  %v171 = vadd.f32 %v42, %v170
  %v172 = vpop.f32.mrb[0].mxu0
  %173 = vdwg.mxu0
  %vm174 = vcmask 523264
  %175 = vst.msk [vmem:[#allocation2] sm:$0xff] %vm174, %v136
  %176 = vst.msk [vmem:[#allocation2 + $0x8] sm:$0xff] %vm174, %v141
  %177 = vst.msk [vmem:[#allocation2 + $0x10] sm:$0xff] %vm174, %v146
  %178 = vst.msk [vmem:[#allocation2 + $0x18] sm:$0xff] %vm174, %v151
  %179 = vst.msk [vmem:[#allocation2 + $0x20] sm:$0xff] %vm174, %v156
  %180 = vst.msk [vmem:[#allocation2 + $0x28] sm:$0xff] %vm174, %v161
  %181 = vst.msk [vmem:[#allocation2 + $0x30] sm:$0xff] %vm174, %v166
  %182 = vst.msk [vmem:[#allocation2 + $0x38] sm:$0xff] %vm174, %v171
  %v183 = vld [vmem:[%s4] sm:$0xff]
  %vm184 = vcmask 130048
  %185 = vst.msk [vmem:[#allocation3] sm:$0xff] %vm184, %v183
  %v186 = vld [vmem:[%s5] sm:$0xff]
  %187 = vst.msk [vmem:[#allocation4] sm:$0xff] %vm184, %v186
  %v188 = vld [vmem:[%s2] sm:$0xff]
  %v189 = vld [vmem:[%s2 + $0x8] sm:$0xff]
  %v190 = vld [vmem:[#allocation3] sm:$0xff]
  %v191 = vld [vmem:[#allocation4] sm:$0xff]
  %v192 = vld [vmem:[#allocation2] sm:$0xff]
  %v194 = vsel %vm184, %v190, 0
  %196 = vmatprep.subr.mxu0 0.0
  %197 = vmatpush1.msra.mxu0 %v188
  %198 = vmatprep.subr.mxu0 0.0
  %199 = vmatpush1.msra.mxu0 %v189
  %200 = vmatprep.subr.mxu0 0.0
  %201 = vmatpush1.msra.mxu0 0.0
  %202 = vmatprep.subr.mxu0 0.0
  %203 = vmatpush1.msra.mxu0 0.0
  %204 = vmatprep.subr.mxu0 0.0
  %205 = vmatpush1.msra.mxu0 0.0
  %206 = vmatprep.subr.mxu0 0.0
  %207 = vmatpush1.msra.mxu0 0.0
  %208 = vmatprep.subr.mxu0 0.0
  %209 = vmatpush1.msra.mxu0 0.0
  %210 = vmatprep.subr.mxu0 0.0
  %211 = vmatpush1.msra.mxu0 0.0
  %212 = vmatprep.subr.mxu0 0.0
  %213 = vmatpush1.msra.mxu0 0.0
  %214 = vmatprep.subr.mxu0 0.0
  %215 = vmatpush1.msra.mxu0 0.0
  %216 = vmatprep.subr.mxu0 0.0
  %217 = vmatpush1.msra.mxu0 0.0
  %218 = vmatprep.subr.mxu0 0.0
  %219 = vmatpush1.msra.mxu0 0.0
  %220 = vmatprep.subr.mxu0 0.0
  %221 = vmatpush1.msra.mxu0 0.0
  %222 = vmatprep.subr.mxu0 0.0
  %223 = vmatpush1.msra.mxu0 0.0
  %224 = vmatprep.subr.mxu0 0.0
  %225 = vmatpush1.msra.mxu0 0.0
  %226 = vmatprep.subr.mxu0 0.0
  %227 = vmatpush1.msra.mxu0 0.0
  %228 = vmatprep.subr.mxu0 0.0
  %229 = vmatpush1.msra.mxu0 0.0
  %230 = vmatprep.subr.mxu0 0.0
  %231 = vmatpush1.msra.mxu0 0.0
  %232 = vmatprep.subr.mxu0 0.0
  %233 = vmatpush1.msra.mxu0 0.0
  %234 = vmatprep.subr.mxu0 0.0
  %235 = vmatpush1.msra.mxu0 0.0
  %236 = vmatprep.subr.mxu0 0.0
  %237 = vmatpush1.msra.mxu0 0.0
  %238 = vmatprep.subr.mxu0 0.0
  %239 = vmatpush1.msra.mxu0 0.0
  %240 = vmatprep.subr.mxu0 0.0
  %241 = vmatpush1.msra.mxu0 0.0
  %242 = vmatprep.subr.mxu0 0.0
  %243 = vmatpush1.msra.mxu0 0.0
  %244 = vmatprep.subr.mxu0 0.0
  %245 = vmatpush1.msra.mxu0 0.0
  %246 = vmatprep.subr.mxu0 0.0
  %247 = vmatpush1.msra.mxu0 0.0
  %248 = vmatprep.subr.mxu0 0.0
  %249 = vmatpush1.msra.mxu0 0.0
  %250 = vmatprep.subr.mxu0 0.0
  %251 = vmatpush1.msra.mxu0 0.0
  %252 = vmatprep.subr.mxu0 0.0
  %253 = vmatpush1.msra.mxu0 0.0
  %254 = vmatprep.subr.mxu0 0.0
  %255 = vmatpush1.msra.mxu0 0.0
  %256 = vmatprep.subr.mxu0 0.0
  %257 = vmatpush1.msra.mxu0 0.0
  %258 = vmatprep.subr.mxu0 0.0
  %259 = vmatpush1.msra.mxu0 0.0
  %260 = vmatprep.mubr.f32.mxu0 0.0
  %261 = vmatmul.mubr.f32.gmra.mrb[0].mxu0 %v194
  %v262 = vpop.f32.mrb[0].mxu0
  %v263 = vadd.f32 0.0, %v262
  %v264 = vpop.f32.mrb[0].mxu0
  %265 = vdwg.mxu0
  %v266 = vadd.f32 %v192, %v263
  %v267 = vxor.u32 %v266, 2147483648
  %v268 = vmul.f32 %v267, 1.442695
  %v269 = vpow.pop %v268
  %v270 = vadd.f32 %v269, 1.0
  %v271 = vrcp.pop %v270
  %v272 = vmul.f32 1.0, %v271
  %v273 = vtanh.pop %v266
  %275 = vrot.lane.b32.xlu0 %v191, 16
  %v276 = vpop.permute.xlu0 %275
  %v278 = vmul.f32 %v272, %v276
  %280 = vrot.lane.b32.xlu0 %v273, 96
  %v281 = vpop.permute.xlu0 %280
  %v283 = vmul.f32 %v272, %v281
  %285 = vrot.lane.b32.xlu0 %v283, 16
  %v286 = vpop.permute.xlu0 %285
  %v288 = vadd.f32 %v278, %v286
  %v289 = vtanh.pop %v288
  %291 = vrot.lane.b32.xlu0 %v289, 32
  %v292 = vpop.permute.xlu0 %291
  %v294 = vmul.f32 %v272, %v292
  %296 = vrot.lane.b32.xlu0 %v294, 80
  %v297 = vpop.permute.xlu0 %296
  %299 = vst.msk [vmem:[#allocation3] sm:$0xff] %vm184, %v297
  %301 = vrot.lane.b32.xlu0 %v288, 112
  %v302 = vpop.permute.xlu0 %301
  %304 = vst.msk [vmem:[#allocation4] sm:$0xff] %vm184, %v302
  %305 = vst.msk [vmem:[%s6] sm:$0xff] %vm184, %v297
  %v306 = vld [vmem:[#allocation3] sm:$0xff]
  %v307 = vld [vmem:[#allocation4] sm:$0xff]
  %s308 = scalar_lea.vmem [#allocation2], 8
  %v309 = vld [vmem:[%s308] sm:$0xff]
  %v311 = vsel %vm184, %v306, 0
  %313 = vmatprep.subr.mxu0 0.0
  %314 = vmatpush1.msra.mxu0 %v188
  %315 = vmatprep.subr.mxu0 0.0
  %316 = vmatpush1.msra.mxu0 %v189
  %317 = vmatprep.subr.mxu0 0.0
  %318 = vmatpush1.msra.mxu0 0.0
  %319 = vmatprep.subr.mxu0 0.0
  %320 = vmatpush1.msra.mxu0 0.0
  %321 = vmatprep.subr.mxu0 0.0
  %322 = vmatpush1.msra.mxu0 0.0
  %323 = vmatprep.subr.mxu0 0.0
  %324 = vmatpush1.msra.mxu0 0.0
  %325 = vmatprep.subr.mxu0 0.0
  %326 = vmatpush1.msra.mxu0 0.0
  %327 = vmatprep.subr.mxu0 0.0
  %328 = vmatpush1.msra.mxu0 0.0
  %329 = vmatprep.subr.mxu0 0.0
  %330 = vmatpush1.msra.mxu0 0.0
  %331 = vmatprep.subr.mxu0 0.0
  %332 = vmatpush1.msra.mxu0 0.0
  %333 = vmatprep.subr.mxu0 0.0
  %334 = vmatpush1.msra.mxu0 0.0
  %335 = vmatprep.subr.mxu0 0.0
  %336 = vmatpush1.msra.mxu0 0.0
  %337 = vmatprep.subr.mxu0 0.0
  %338 = vmatpush1.msra.mxu0 0.0
  %339 = vmatprep.subr.mxu0 0.0
  %340 = vmatpush1.msra.mxu0 0.0
  %341 = vmatprep.subr.mxu0 0.0
  %342 = vmatpush1.msra.mxu0 0.0
  %343 = vmatprep.subr.mxu0 0.0
  %344 = vmatpush1.msra.mxu0 0.0
  %345 = vmatprep.subr.mxu0 0.0
  %346 = vmatpush1.msra.mxu0 0.0
  %347 = vmatprep.subr.mxu0 0.0
  %348 = vmatpush1.msra.mxu0 0.0
  %349 = vmatprep.subr.mxu0 0.0
  %350 = vmatpush1.msra.mxu0 0.0
  %351 = vmatprep.subr.mxu0 0.0
  %352 = vmatpush1.msra.mxu0 0.0
  %353 = vmatprep.subr.mxu0 0.0
  %354 = vmatpush1.msra.mxu0 0.0
  %355 = vmatprep.subr.mxu0 0.0
  %356 = vmatpush1.msra.mxu0 0.0
  %357 = vmatprep.subr.mxu0 0.0
  %358 = vmatpush1.msra.mxu0 0.0
  %359 = vmatprep.subr.mxu0 0.0
  %360 = vmatpush1.msra.mxu0 0.0
  %361 = vmatprep.subr.mxu0 0.0
  %362 = vmatpush1.msra.mxu0 0.0
  %363 = vmatprep.subr.mxu0 0.0
  %364 = vmatpush1.msra.mxu0 0.0
  %365 = vmatprep.subr.mxu0 0.0
  %366 = vmatpush1.msra.mxu0 0.0
  %367 = vmatprep.subr.mxu0 0.0
  %368 = vmatpush1.msra.mxu0 0.0
  %369 = vmatprep.subr.mxu0 0.0
  %370 = vmatpush1.msra.mxu0 0.0
  %371 = vmatprep.subr.mxu0 0.0
  %372 = vmatpush1.msra.mxu0 0.0
  %373 = vmatprep.subr.mxu0 0.0
  %374 = vmatpush1.msra.mxu0 0.0
  %375 = vmatprep.subr.mxu0 0.0
  %376 = vmatpush1.msra.mxu0 0.0
  %377 = vmatprep.mubr.f32.mxu0 0.0
  %378 = vmatmul.mubr.f32.gmra.mrb[0].mxu0 %v311
  %v379 = vpop.f32.mrb[0].mxu0
  %v380 = vadd.f32 0.0, %v379
  %v381 = vpop.f32.mrb[0].mxu0
  %382 = vdwg.mxu0
  %v383 = vadd.f32 %v309, %v380
  %v384 = vxor.u32 %v383, 2147483648
  %v385 = vmul.f32 %v384, 1.442695
  %v386 = vpow.pop %v385
  %v387 = vadd.f32 %v386, 1.0
  %v388 = vrcp.pop %v387
  %v389 = vmul.f32 1.0, %v388
  %v390 = vtanh.pop %v383
  %392 = vrot.lane.b32.xlu0 %v307, 16
  %v393 = vpop.permute.xlu0 %392
  %v395 = vmul.f32 %v389, %v393
  %397 = vrot.lane.b32.xlu0 %v390, 96
  %v398 = vpop.permute.xlu0 %397
  %v400 = vmul.f32 %v389, %v398
  %402 = vrot.lane.b32.xlu0 %v400, 16
  %v403 = vpop.permute.xlu0 %402
  %v405 = vadd.f32 %v395, %v403
  %v406 = vtanh.pop %v405
  %408 = vrot.lane.b32.xlu0 %v406, 32
  %v409 = vpop.permute.xlu0 %408
  %v411 = vmul.f32 %v389, %v409
  %413 = vrot.lane.b32.xlu0 %v411, 80
  %v414 = vpop.permute.xlu0 %413
  %416 = vst.msk [vmem:[#allocation3] sm:$0xff] %vm184, %v414
  %418 = vrot.lane.b32.xlu0 %v405, 112
  %v419 = vpop.permute.xlu0 %418
  %421 = vst.msk [vmem:[#allocation4] sm:$0xff] %vm184, %v419
  %s422 = scalar_lea.vmem %s6, 8
  %423 = vst.msk [vmem:[%s422] sm:$0xff] %vm184, %v414
  %v424 = vld [vmem:[#allocation3] sm:$0xff]
  %v425 = vld [vmem:[#allocation4] sm:$0xff]
  %s426 = scalar_lea.vmem [#allocation2], 16
  %v427 = vld [vmem:[%s426] sm:$0xff]
  %v429 = vsel %vm184, %v424, 0
  %431 = vmatprep.subr.mxu0 0.0
  %432 = vmatpush1.msra.mxu0 %v188
  %433 = vmatprep.subr.mxu0 0.0
  %434 = vmatpush1.msra.mxu0 %v189
  %435 = vmatprep.subr.mxu0 0.0
  %436 = vmatpush1.msra.mxu0 0.0
  %437 = vmatprep.subr.mxu0 0.0
  %438 = vmatpush1.msra.mxu0 0.0
  %439 = vmatprep.subr.mxu0 0.0
  %440 = vmatpush1.msra.mxu0 0.0
  %441 = vmatprep.subr.mxu0 0.0
  %442 = vmatpush1.msra.mxu0 0.0
  %443 = vmatprep.subr.mxu0 0.0
  %444 = vmatpush1.msra.mxu0 0.0
  %445 = vmatprep.subr.mxu0 0.0
  %446 = vmatpush1.msra.mxu0 0.0
  %447 = vmatprep.subr.mxu0 0.0
  %448 = vmatpush1.msra.mxu0 0.0
  %449 = vmatprep.subr.mxu0 0.0
  %450 = vmatpush1.msra.mxu0 0.0
  %451 = vmatprep.subr.mxu0 0.0
  %452 = vmatpush1.msra.mxu0 0.0
  %453 = vmatprep.subr.mxu0 0.0
  %454 = vmatpush1.msra.mxu0 0.0
  %455 = vmatprep.subr.mxu0 0.0
  %456 = vmatpush1.msra.mxu0 0.0
  %457 = vmatprep.subr.mxu0 0.0
  %458 = vmatpush1.msra.mxu0 0.0
  %459 = vmatprep.subr.mxu0 0.0
  %460 = vmatpush1.msra.mxu0 0.0
  %461 = vmatprep.subr.mxu0 0.0
  %462 = vmatpush1.msra.mxu0 0.0
  %463 = vmatprep.subr.mxu0 0.0
  %464 = vmatpush1.msra.mxu0 0.0
  %465 = vmatprep.subr.mxu0 0.0
  %466 = vmatpush1.msra.mxu0 0.0
  %467 = vmatprep.subr.mxu0 0.0
  %468 = vmatpush1.msra.mxu0 0.0
  %469 = vmatprep.subr.mxu0 0.0
  %470 = vmatpush1.msra.mxu0 0.0
  %471 = vmatprep.subr.mxu0 0.0
  %472 = vmatpush1.msra.mxu0 0.0
  %473 = vmatprep.subr.mxu0 0.0
  %474 = vmatpush1.msra.mxu0 0.0
  %475 = vmatprep.subr.mxu0 0.0
  %476 = vmatpush1.msra.mxu0 0.0
  %477 = vmatprep.subr.mxu0 0.0
  %478 = vmatpush1.msra.mxu0 0.0
  %479 = vmatprep.subr.mxu0 0.0
  %480 = vmatpush1.msra.mxu0 0.0
  %481 = vmatprep.subr.mxu0 0.0
  %482 = vmatpush1.msra.mxu0 0.0
  %483 = vmatprep.subr.mxu0 0.0
  %484 = vmatpush1.msra.mxu0 0.0
  %485 = vmatprep.subr.mxu0 0.0
  %486 = vmatpush1.msra.mxu0 0.0
  %487 = vmatprep.subr.mxu0 0.0
  %488 = vmatpush1.msra.mxu0 0.0
  %489 = vmatprep.subr.mxu0 0.0
  %490 = vmatpush1.msra.mxu0 0.0
  %491 = vmatprep.subr.mxu0 0.0
  %492 = vmatpush1.msra.mxu0 0.0
  %493 = vmatprep.subr.mxu0 0.0
  %494 = vmatpush1.msra.mxu0 0.0
  %495 = vmatprep.mubr.f32.mxu0 0.0
  %496 = vmatmul.mubr.f32.gmra.mrb[0].mxu0 %v429
  %v497 = vpop.f32.mrb[0].mxu0
  %v498 = vadd.f32 0.0, %v497
  %v499 = vpop.f32.mrb[0].mxu0
  %500 = vdwg.mxu0
  %v501 = vadd.f32 %v427, %v498
  %v502 = vxor.u32 %v501, 2147483648
  %v503 = vmul.f32 %v502, 1.442695
  %v504 = vpow.pop %v503
  %v505 = vadd.f32 %v504, 1.0
  %v506 = vrcp.pop %v505
  %v507 = vmul.f32 1.0, %v506
  %v508 = vtanh.pop %v501
  %510 = vrot.lane.b32.xlu0 %v425, 16
  %v511 = vpop.permute.xlu0 %510
  %v513 = vmul.f32 %v507, %v511
  %515 = vrot.lane.b32.xlu0 %v508, 96
  %v516 = vpop.permute.xlu0 %515
  %v518 = vmul.f32 %v507, %v516
  %520 = vrot.lane.b32.xlu0 %v518, 16
  %v521 = vpop.permute.xlu0 %520
  %v523 = vadd.f32 %v513, %v521
  %v524 = vtanh.pop %v523
  %526 = vrot.lane.b32.xlu0 %v524, 32
  %v527 = vpop.permute.xlu0 %526
  %v529 = vmul.f32 %v507, %v527
  %531 = vrot.lane.b32.xlu0 %v529, 80
  %v532 = vpop.permute.xlu0 %531
  %534 = vst.msk [vmem:[#allocation3] sm:$0xff] %vm184, %v532
  %536 = vrot.lane.b32.xlu0 %v523, 112
  %v537 = vpop.permute.xlu0 %536
  %539 = vst.msk [vmem:[#allocation4] sm:$0xff] %vm184, %v537
  %s540 = scalar_lea.vmem %s6, 16
  %541 = vst.msk [vmem:[%s540] sm:$0xff] %vm184, %v532
  %v542 = vld [vmem:[#allocation3] sm:$0xff]
  %v543 = vld [vmem:[#allocation4] sm:$0xff]
  %s544 = scalar_lea.vmem [#allocation2], 24
  %v545 = vld [vmem:[%s544] sm:$0xff]
  %v547 = vsel %vm184, %v542, 0
  %549 = vmatprep.subr.mxu0 0.0
  %550 = vmatpush1.msra.mxu0 %v188
  %551 = vmatprep.subr.mxu0 0.0
  %552 = vmatpush1.msra.mxu0 %v189
  %553 = vmatprep.subr.mxu0 0.0
  %554 = vmatpush1.msra.mxu0 0.0
  %555 = vmatprep.subr.mxu0 0.0
  %556 = vmatpush1.msra.mxu0 0.0
  %557 = vmatprep.subr.mxu0 0.0
  %558 = vmatpush1.msra.mxu0 0.0
  %559 = vmatprep.subr.mxu0 0.0
  %560 = vmatpush1.msra.mxu0 0.0
  %561 = vmatprep.subr.mxu0 0.0
  %562 = vmatpush1.msra.mxu0 0.0
  %563 = vmatprep.subr.mxu0 0.0
  %564 = vmatpush1.msra.mxu0 0.0
  %565 = vmatprep.subr.mxu0 0.0
  %566 = vmatpush1.msra.mxu0 0.0
  %567 = vmatprep.subr.mxu0 0.0
  %568 = vmatpush1.msra.mxu0 0.0
  %569 = vmatprep.subr.mxu0 0.0
  %570 = vmatpush1.msra.mxu0 0.0
  %571 = vmatprep.subr.mxu0 0.0
  %572 = vmatpush1.msra.mxu0 0.0
  %573 = vmatprep.subr.mxu0 0.0
  %574 = vmatpush1.msra.mxu0 0.0
  %575 = vmatprep.subr.mxu0 0.0
  %576 = vmatpush1.msra.mxu0 0.0
  %577 = vmatprep.subr.mxu0 0.0
  %578 = vmatpush1.msra.mxu0 0.0
  %579 = vmatprep.subr.mxu0 0.0
  %580 = vmatpush1.msra.mxu0 0.0
  %581 = vmatprep.subr.mxu0 0.0
  %582 = vmatpush1.msra.mxu0 0.0
  %583 = vmatprep.subr.mxu0 0.0
  %584 = vmatpush1.msra.mxu0 0.0
  %585 = vmatprep.subr.mxu0 0.0
  %586 = vmatpush1.msra.mxu0 0.0
  %587 = vmatprep.subr.mxu0 0.0
  %588 = vmatpush1.msra.mxu0 0.0
  %589 = vmatprep.subr.mxu0 0.0
  %590 = vmatpush1.msra.mxu0 0.0
  %591 = vmatprep.subr.mxu0 0.0
  %592 = vmatpush1.msra.mxu0 0.0
  %593 = vmatprep.subr.mxu0 0.0
  %594 = vmatpush1.msra.mxu0 0.0
  %595 = vmatprep.subr.mxu0 0.0
  %596 = vmatpush1.msra.mxu0 0.0
  %597 = vmatprep.subr.mxu0 0.0
  %598 = vmatpush1.msra.mxu0 0.0
  %599 = vmatprep.subr.mxu0 0.0
  %600 = vmatpush1.msra.mxu0 0.0
  %601 = vmatprep.subr.mxu0 0.0
  %602 = vmatpush1.msra.mxu0 0.0
  %603 = vmatprep.subr.mxu0 0.0
  %604 = vmatpush1.msra.mxu0 0.0
  %605 = vmatprep.subr.mxu0 0.0
  %606 = vmatpush1.msra.mxu0 0.0
  %607 = vmatprep.subr.mxu0 0.0
  %608 = vmatpush1.msra.mxu0 0.0
  %609 = vmatprep.subr.mxu0 0.0
  %610 = vmatpush1.msra.mxu0 0.0
  %611 = vmatprep.subr.mxu0 0.0
  %612 = vmatpush1.msra.mxu0 0.0
  %613 = vmatprep.mubr.f32.mxu0 0.0
  %614 = vmatmul.mubr.f32.gmra.mrb[0].mxu0 %v547
  %v615 = vpop.f32.mrb[0].mxu0
  %v616 = vadd.f32 0.0, %v615
  %v617 = vpop.f32.mrb[0].mxu0
  %618 = vdwg.mxu0
  %v619 = vadd.f32 %v545, %v616
  %v620 = vxor.u32 %v619, 2147483648
  %v621 = vmul.f32 %v620, 1.442695
  %v622 = vpow.pop %v621
  %v623 = vadd.f32 %v622, 1.0
  %v624 = vrcp.pop %v623
  %v625 = vmul.f32 1.0, %v624
  %v626 = vtanh.pop %v619
  %628 = vrot.lane.b32.xlu0 %v543, 16
  %v629 = vpop.permute.xlu0 %628
  %v631 = vmul.f32 %v625, %v629
  %633 = vrot.lane.b32.xlu0 %v626, 96
  %v634 = vpop.permute.xlu0 %633
  %v636 = vmul.f32 %v625, %v634
  %638 = vrot.lane.b32.xlu0 %v636, 16
  %v639 = vpop.permute.xlu0 %638
  %v641 = vadd.f32 %v631, %v639
  %v642 = vtanh.pop %v641
  %644 = vrot.lane.b32.xlu0 %v642, 32
  %v645 = vpop.permute.xlu0 %644
  %v647 = vmul.f32 %v625, %v645
  %649 = vrot.lane.b32.xlu0 %v647, 80
  %v650 = vpop.permute.xlu0 %649
  %652 = vst.msk [vmem:[#allocation3] sm:$0xff] %vm184, %v650
  %654 = vrot.lane.b32.xlu0 %v641, 112
  %v655 = vpop.permute.xlu0 %654
  %657 = vst.msk [vmem:[#allocation4] sm:$0xff] %vm184, %v655
  %s658 = scalar_lea.vmem %s6, 24
  %659 = vst.msk [vmem:[%s658] sm:$0xff] %vm184, %v650
  %v660 = vld [vmem:[#allocation3] sm:$0xff]
  %v661 = vld [vmem:[#allocation4] sm:$0xff]
  %s662 = scalar_lea.vmem [#allocation2], 32
  %v663 = vld [vmem:[%s662] sm:$0xff]
  %v665 = vsel %vm184, %v660, 0
  %667 = vmatprep.subr.mxu0 0.0
  %668 = vmatpush1.msra.mxu0 %v188
  %669 = vmatprep.subr.mxu0 0.0
  %670 = vmatpush1.msra.mxu0 %v189
  %671 = vmatprep.subr.mxu0 0.0
  %672 = vmatpush1.msra.mxu0 0.0
  %673 = vmatprep.subr.mxu0 0.0
  %674 = vmatpush1.msra.mxu0 0.0
  %675 = vmatprep.subr.mxu0 0.0
  %676 = vmatpush1.msra.mxu0 0.0
  %677 = vmatprep.subr.mxu0 0.0
  %678 = vmatpush1.msra.mxu0 0.0
  %679 = vmatprep.subr.mxu0 0.0
  %680 = vmatpush1.msra.mxu0 0.0
  %681 = vmatprep.subr.mxu0 0.0
  %682 = vmatpush1.msra.mxu0 0.0
  %683 = vmatprep.subr.mxu0 0.0
  %684 = vmatpush1.msra.mxu0 0.0
  %685 = vmatprep.subr.mxu0 0.0
  %686 = vmatpush1.msra.mxu0 0.0
  %687 = vmatprep.subr.mxu0 0.0
  %688 = vmatpush1.msra.mxu0 0.0
  %689 = vmatprep.subr.mxu0 0.0
  %690 = vmatpush1.msra.mxu0 0.0
  %691 = vmatprep.subr.mxu0 0.0
  %692 = vmatpush1.msra.mxu0 0.0
  %693 = vmatprep.subr.mxu0 0.0
  %694 = vmatpush1.msra.mxu0 0.0
  %695 = vmatprep.subr.mxu0 0.0
  %696 = vmatpush1.msra.mxu0 0.0
  %697 = vmatprep.subr.mxu0 0.0
  %698 = vmatpush1.msra.mxu0 0.0
  %699 = vmatprep.subr.mxu0 0.0
  %700 = vmatpush1.msra.mxu0 0.0
  %701 = vmatprep.subr.mxu0 0.0
  %702 = vmatpush1.msra.mxu0 0.0
  %703 = vmatprep.subr.mxu0 0.0
  %704 = vmatpush1.msra.mxu0 0.0
  %705 = vmatprep.subr.mxu0 0.0
  %706 = vmatpush1.msra.mxu0 0.0
  %707 = vmatprep.subr.mxu0 0.0
  %708 = vmatpush1.msra.mxu0 0.0
  %709 = vmatprep.subr.mxu0 0.0
  %710 = vmatpush1.msra.mxu0 0.0
  %711 = vmatprep.subr.mxu0 0.0
  %712 = vmatpush1.msra.mxu0 0.0
  %713 = vmatprep.subr.mxu0 0.0
  %714 = vmatpush1.msra.mxu0 0.0
  %715 = vmatprep.subr.mxu0 0.0
  %716 = vmatpush1.msra.mxu0 0.0
  %717 = vmatprep.subr.mxu0 0.0
  %718 = vmatpush1.msra.mxu0 0.0
  %719 = vmatprep.subr.mxu0 0.0
  %720 = vmatpush1.msra.mxu0 0.0
  %721 = vmatprep.subr.mxu0 0.0
  %722 = vmatpush1.msra.mxu0 0.0
  %723 = vmatprep.subr.mxu0 0.0
  %724 = vmatpush1.msra.mxu0 0.0
  %725 = vmatprep.subr.mxu0 0.0
  %726 = vmatpush1.msra.mxu0 0.0
  %727 = vmatprep.subr.mxu0 0.0
  %728 = vmatpush1.msra.mxu0 0.0
  %729 = vmatprep.subr.mxu0 0.0
  %730 = vmatpush1.msra.mxu0 0.0
  %731 = vmatprep.mubr.f32.mxu0 0.0
  %732 = vmatmul.mubr.f32.gmra.mrb[0].mxu0 %v665
  %v733 = vpop.f32.mrb[0].mxu0
  %v734 = vadd.f32 0.0, %v733
  %v735 = vpop.f32.mrb[0].mxu0
  %736 = vdwg.mxu0
  %v737 = vadd.f32 %v663, %v734
  %v738 = vxor.u32 %v737, 2147483648
  %v739 = vmul.f32 %v738, 1.442695
  %v740 = vpow.pop %v739
  %v741 = vadd.f32 %v740, 1.0
  %v742 = vrcp.pop %v741
  %v743 = vmul.f32 1.0, %v742
  %v744 = vtanh.pop %v737
  %746 = vrot.lane.b32.xlu0 %v661, 16
  %v747 = vpop.permute.xlu0 %746
  %v749 = vmul.f32 %v743, %v747
  %751 = vrot.lane.b32.xlu0 %v744, 96
  %v752 = vpop.permute.xlu0 %751
  %v754 = vmul.f32 %v743, %v752
  %756 = vrot.lane.b32.xlu0 %v754, 16
  %v757 = vpop.permute.xlu0 %756
  %v759 = vadd.f32 %v749, %v757
  %v760 = vtanh.pop %v759
  %762 = vrot.lane.b32.xlu0 %v760, 32
  %v763 = vpop.permute.xlu0 %762
  %v765 = vmul.f32 %v743, %v763
  %767 = vrot.lane.b32.xlu0 %v765, 80
  %v768 = vpop.permute.xlu0 %767
  %770 = vst.msk [vmem:[#allocation3] sm:$0xff] %vm184, %v768
  %772 = vrot.lane.b32.xlu0 %v759, 112
  %v773 = vpop.permute.xlu0 %772
  %775 = vst.msk [vmem:[#allocation4] sm:$0xff] %vm184, %v773
  %s776 = scalar_lea.vmem %s6, 32
  %777 = vst.msk [vmem:[%s776] sm:$0xff] %vm184, %v768
  %v778 = vld [vmem:[#allocation3] sm:$0xff]
  %v779 = vld [vmem:[#allocation4] sm:$0xff]
  %s780 = scalar_lea.vmem [#allocation2], 40
  %v781 = vld [vmem:[%s780] sm:$0xff]
  %v783 = vsel %vm184, %v778, 0
  %785 = vmatprep.subr.mxu0 0.0
  %786 = vmatpush1.msra.mxu0 %v188
  %787 = vmatprep.subr.mxu0 0.0
  %788 = vmatpush1.msra.mxu0 %v189
  %789 = vmatprep.subr.mxu0 0.0
  %790 = vmatpush1.msra.mxu0 0.0
  %791 = vmatprep.subr.mxu0 0.0
  %792 = vmatpush1.msra.mxu0 0.0
  %793 = vmatprep.subr.mxu0 0.0
  %794 = vmatpush1.msra.mxu0 0.0
  %795 = vmatprep.subr.mxu0 0.0
  %796 = vmatpush1.msra.mxu0 0.0
  %797 = vmatprep.subr.mxu0 0.0
  %798 = vmatpush1.msra.mxu0 0.0
  %799 = vmatprep.subr.mxu0 0.0
  %800 = vmatpush1.msra.mxu0 0.0
  %801 = vmatprep.subr.mxu0 0.0
  %802 = vmatpush1.msra.mxu0 0.0
  %803 = vmatprep.subr.mxu0 0.0
  %804 = vmatpush1.msra.mxu0 0.0
  %805 = vmatprep.subr.mxu0 0.0
  %806 = vmatpush1.msra.mxu0 0.0
  %807 = vmatprep.subr.mxu0 0.0
  %808 = vmatpush1.msra.mxu0 0.0
  %809 = vmatprep.subr.mxu0 0.0
  %810 = vmatpush1.msra.mxu0 0.0
  %811 = vmatprep.subr.mxu0 0.0
  %812 = vmatpush1.msra.mxu0 0.0
  %813 = vmatprep.subr.mxu0 0.0
  %814 = vmatpush1.msra.mxu0 0.0
  %815 = vmatprep.subr.mxu0 0.0
  %816 = vmatpush1.msra.mxu0 0.0
  %817 = vmatprep.subr.mxu0 0.0
  %818 = vmatpush1.msra.mxu0 0.0
  %819 = vmatprep.subr.mxu0 0.0
  %820 = vmatpush1.msra.mxu0 0.0
  %821 = vmatprep.subr.mxu0 0.0
  %822 = vmatpush1.msra.mxu0 0.0
  %823 = vmatprep.subr.mxu0 0.0
  %824 = vmatpush1.msra.mxu0 0.0
  %825 = vmatprep.subr.mxu0 0.0
  %826 = vmatpush1.msra.mxu0 0.0
  %827 = vmatprep.subr.mxu0 0.0
  %828 = vmatpush1.msra.mxu0 0.0
  %829 = vmatprep.subr.mxu0 0.0
  %830 = vmatpush1.msra.mxu0 0.0
  %831 = vmatprep.subr.mxu0 0.0
  %832 = vmatpush1.msra.mxu0 0.0
  %833 = vmatprep.subr.mxu0 0.0
  %834 = vmatpush1.msra.mxu0 0.0
  %835 = vmatprep.subr.mxu0 0.0
  %836 = vmatpush1.msra.mxu0 0.0
  %837 = vmatprep.subr.mxu0 0.0
  %838 = vmatpush1.msra.mxu0 0.0
  %839 = vmatprep.subr.mxu0 0.0
  %840 = vmatpush1.msra.mxu0 0.0
  %841 = vmatprep.subr.mxu0 0.0
  %842 = vmatpush1.msra.mxu0 0.0
  %843 = vmatprep.subr.mxu0 0.0
  %844 = vmatpush1.msra.mxu0 0.0
  %845 = vmatprep.subr.mxu0 0.0
  %846 = vmatpush1.msra.mxu0 0.0
  %847 = vmatprep.subr.mxu0 0.0
  %848 = vmatpush1.msra.mxu0 0.0
  %849 = vmatprep.mubr.f32.mxu0 0.0
  %850 = vmatmul.mubr.f32.gmra.mrb[0].mxu0 %v783
  %v851 = vpop.f32.mrb[0].mxu0
  %v852 = vadd.f32 0.0, %v851
  %v853 = vpop.f32.mrb[0].mxu0
  %854 = vdwg.mxu0
  %v855 = vadd.f32 %v781, %v852
  %v856 = vxor.u32 %v855, 2147483648
  %v857 = vmul.f32 %v856, 1.442695
  %v858 = vpow.pop %v857
  %v859 = vadd.f32 %v858, 1.0
  %v860 = vrcp.pop %v859
  %v861 = vmul.f32 1.0, %v860
  %v862 = vtanh.pop %v855
  %864 = vrot.lane.b32.xlu0 %v779, 16
  %v865 = vpop.permute.xlu0 %864
  %v867 = vmul.f32 %v861, %v865
  %869 = vrot.lane.b32.xlu0 %v862, 96
  %v870 = vpop.permute.xlu0 %869
  %v872 = vmul.f32 %v861, %v870
  %874 = vrot.lane.b32.xlu0 %v872, 16
  %v875 = vpop.permute.xlu0 %874
  %v877 = vadd.f32 %v867, %v875
  %v878 = vtanh.pop %v877
  %880 = vrot.lane.b32.xlu0 %v878, 32
  %v881 = vpop.permute.xlu0 %880
  %v883 = vmul.f32 %v861, %v881
  %885 = vrot.lane.b32.xlu0 %v883, 80
  %v886 = vpop.permute.xlu0 %885
  %888 = vst.msk [vmem:[#allocation3] sm:$0xff] %vm184, %v886
  %890 = vrot.lane.b32.xlu0 %v877, 112
  %v891 = vpop.permute.xlu0 %890
  %893 = vst.msk [vmem:[#allocation4] sm:$0xff] %vm184, %v891
  %s894 = scalar_lea.vmem %s6, 40
  %895 = vst.msk [vmem:[%s894] sm:$0xff] %vm184, %v886
  %v896 = vld [vmem:[#allocation3] sm:$0xff]
  %v897 = vld [vmem:[#allocation4] sm:$0xff]
  %s898 = scalar_lea.vmem [#allocation2], 48
  %v899 = vld [vmem:[%s898] sm:$0xff]
  %v901 = vsel %vm184, %v896, 0
  %903 = vmatprep.subr.mxu0 0.0
  %904 = vmatpush1.msra.mxu0 %v188
  %905 = vmatprep.subr.mxu0 0.0
  %906 = vmatpush1.msra.mxu0 %v189
  %907 = vmatprep.subr.mxu0 0.0
  %908 = vmatpush1.msra.mxu0 0.0
  %909 = vmatprep.subr.mxu0 0.0
  %910 = vmatpush1.msra.mxu0 0.0
  %911 = vmatprep.subr.mxu0 0.0
  %912 = vmatpush1.msra.mxu0 0.0
  %913 = vmatprep.subr.mxu0 0.0
  %914 = vmatpush1.msra.mxu0 0.0
  %915 = vmatprep.subr.mxu0 0.0
  %916 = vmatpush1.msra.mxu0 0.0
  %917 = vmatprep.subr.mxu0 0.0
  %918 = vmatpush1.msra.mxu0 0.0
  %919 = vmatprep.subr.mxu0 0.0
  %920 = vmatpush1.msra.mxu0 0.0
  %921 = vmatprep.subr.mxu0 0.0
  %922 = vmatpush1.msra.mxu0 0.0
  %923 = vmatprep.subr.mxu0 0.0
  %924 = vmatpush1.msra.mxu0 0.0
  %925 = vmatprep.subr.mxu0 0.0
  %926 = vmatpush1.msra.mxu0 0.0
  %927 = vmatprep.subr.mxu0 0.0
  %928 = vmatpush1.msra.mxu0 0.0
  %929 = vmatprep.subr.mxu0 0.0
  %930 = vmatpush1.msra.mxu0 0.0
  %931 = vmatprep.subr.mxu0 0.0
  %932 = vmatpush1.msra.mxu0 0.0
  %933 = vmatprep.subr.mxu0 0.0
  %934 = vmatpush1.msra.mxu0 0.0
  %935 = vmatprep.subr.mxu0 0.0
  %936 = vmatpush1.msra.mxu0 0.0
  %937 = vmatprep.subr.mxu0 0.0
  %938 = vmatpush1.msra.mxu0 0.0
  %939 = vmatprep.subr.mxu0 0.0
  %940 = vmatpush1.msra.mxu0 0.0
  %941 = vmatprep.subr.mxu0 0.0
  %942 = vmatpush1.msra.mxu0 0.0
  %943 = vmatprep.subr.mxu0 0.0
  %944 = vmatpush1.msra.mxu0 0.0
  %945 = vmatprep.subr.mxu0 0.0
  %946 = vmatpush1.msra.mxu0 0.0
  %947 = vmatprep.subr.mxu0 0.0
  %948 = vmatpush1.msra.mxu0 0.0
  %949 = vmatprep.subr.mxu0 0.0
  %950 = vmatpush1.msra.mxu0 0.0
  %951 = vmatprep.subr.mxu0 0.0
  %952 = vmatpush1.msra.mxu0 0.0
  %953 = vmatprep.subr.mxu0 0.0
  %954 = vmatpush1.msra.mxu0 0.0
  %955 = vmatprep.subr.mxu0 0.0
  %956 = vmatpush1.msra.mxu0 0.0
  %957 = vmatprep.subr.mxu0 0.0
  %958 = vmatpush1.msra.mxu0 0.0
  %959 = vmatprep.subr.mxu0 0.0
  %960 = vmatpush1.msra.mxu0 0.0
  %961 = vmatprep.subr.mxu0 0.0
  %962 = vmatpush1.msra.mxu0 0.0
  %963 = vmatprep.subr.mxu0 0.0
  %964 = vmatpush1.msra.mxu0 0.0
  %965 = vmatprep.subr.mxu0 0.0
  %966 = vmatpush1.msra.mxu0 0.0
  %967 = vmatprep.mubr.f32.mxu0 0.0
  %968 = vmatmul.mubr.f32.gmra.mrb[0].mxu0 %v901
  %v969 = vpop.f32.mrb[0].mxu0
  %v970 = vadd.f32 0.0, %v969
  %v971 = vpop.f32.mrb[0].mxu0
  %972 = vdwg.mxu0
  %v973 = vadd.f32 %v899, %v970
  %v974 = vxor.u32 %v973, 2147483648
  %v975 = vmul.f32 %v974, 1.442695
  %v976 = vpow.pop %v975
  %v977 = vadd.f32 %v976, 1.0
  %v978 = vrcp.pop %v977
  %v979 = vmul.f32 1.0, %v978
  %v980 = vtanh.pop %v973
  %982 = vrot.lane.b32.xlu0 %v897, 16
  %v983 = vpop.permute.xlu0 %982
  %v985 = vmul.f32 %v979, %v983
  %987 = vrot.lane.b32.xlu0 %v980, 96
  %v988 = vpop.permute.xlu0 %987
  %v990 = vmul.f32 %v979, %v988
  %992 = vrot.lane.b32.xlu0 %v990, 16
  %v993 = vpop.permute.xlu0 %992
  %v995 = vadd.f32 %v985, %v993
  %v996 = vtanh.pop %v995
  %998 = vrot.lane.b32.xlu0 %v996, 32
  %v999 = vpop.permute.xlu0 %998
  %v1001 = vmul.f32 %v979, %v999
  %1003 = vrot.lane.b32.xlu0 %v1001, 80
  %v1004 = vpop.permute.xlu0 %1003
  %1006 = vst.msk [vmem:[#allocation3] sm:$0xff] %vm184, %v1004
  %1008 = vrot.lane.b32.xlu0 %v995, 112
  %v1009 = vpop.permute.xlu0 %1008
  %1011 = vst.msk [vmem:[#allocation4] sm:$0xff] %vm184, %v1009
  %s1012 = scalar_lea.vmem %s6, 48
  %1013 = vst.msk [vmem:[%s1012] sm:$0xff] %vm184, %v1004
  %v1014 = vld [vmem:[#allocation3] sm:$0xff]
  %v1015 = vld [vmem:[#allocation4] sm:$0xff]
  %s1016 = scalar_lea.vmem [#allocation2], 56
  %v1017 = vld [vmem:[%s1016] sm:$0xff]
  %v1019 = vsel %vm184, %v1014, 0
  %1021 = vmatprep.subr.mxu0 0.0
  %1022 = vmatpush1.msra.mxu0 %v188
  %1023 = vmatprep.subr.mxu0 0.0
  %1024 = vmatpush1.msra.mxu0 %v189
  %1025 = vmatprep.subr.mxu0 0.0
  %1026 = vmatpush1.msra.mxu0 0.0
  %1027 = vmatprep.subr.mxu0 0.0
  %1028 = vmatpush1.msra.mxu0 0.0
  %1029 = vmatprep.subr.mxu0 0.0
  %1030 = vmatpush1.msra.mxu0 0.0
  %1031 = vmatprep.subr.mxu0 0.0
  %1032 = vmatpush1.msra.mxu0 0.0
  %1033 = vmatprep.subr.mxu0 0.0
  %1034 = vmatpush1.msra.mxu0 0.0
  %1035 = vmatprep.subr.mxu0 0.0
  %1036 = vmatpush1.msra.mxu0 0.0
  %1037 = vmatprep.subr.mxu0 0.0
  %1038 = vmatpush1.msra.mxu0 0.0
  %1039 = vmatprep.subr.mxu0 0.0
  %1040 = vmatpush1.msra.mxu0 0.0
  %1041 = vmatprep.subr.mxu0 0.0
  %1042 = vmatpush1.msra.mxu0 0.0
  %1043 = vmatprep.subr.mxu0 0.0
  %1044 = vmatpush1.msra.mxu0 0.0
  %1045 = vmatprep.subr.mxu0 0.0
  %1046 = vmatpush1.msra.mxu0 0.0
  %1047 = vmatprep.subr.mxu0 0.0
  %1048 = vmatpush1.msra.mxu0 0.0
  %1049 = vmatprep.subr.mxu0 0.0
  %1050 = vmatpush1.msra.mxu0 0.0
  %1051 = vmatprep.subr.mxu0 0.0
  %1052 = vmatpush1.msra.mxu0 0.0
  %1053 = vmatprep.subr.mxu0 0.0
  %1054 = vmatpush1.msra.mxu0 0.0
  %1055 = vmatprep.subr.mxu0 0.0
  %1056 = vmatpush1.msra.mxu0 0.0
  %1057 = vmatprep.subr.mxu0 0.0
  %1058 = vmatpush1.msra.mxu0 0.0
  %1059 = vmatprep.subr.mxu0 0.0
  %1060 = vmatpush1.msra.mxu0 0.0
  %1061 = vmatprep.subr.mxu0 0.0
  %1062 = vmatpush1.msra.mxu0 0.0
  %1063 = vmatprep.subr.mxu0 0.0
  %1064 = vmatpush1.msra.mxu0 0.0
  %1065 = vmatprep.subr.mxu0 0.0
  %1066 = vmatpush1.msra.mxu0 0.0
  %1067 = vmatprep.subr.mxu0 0.0
  %1068 = vmatpush1.msra.mxu0 0.0
  %1069 = vmatprep.subr.mxu0 0.0
  %1070 = vmatpush1.msra.mxu0 0.0
  %1071 = vmatprep.subr.mxu0 0.0
  %1072 = vmatpush1.msra.mxu0 0.0
  %1073 = vmatprep.subr.mxu0 0.0
  %1074 = vmatpush1.msra.mxu0 0.0
  %1075 = vmatprep.subr.mxu0 0.0
  %1076 = vmatpush1.msra.mxu0 0.0
  %1077 = vmatprep.subr.mxu0 0.0
  %1078 = vmatpush1.msra.mxu0 0.0
  %1079 = vmatprep.subr.mxu0 0.0
  %1080 = vmatpush1.msra.mxu0 0.0
  %1081 = vmatprep.subr.mxu0 0.0
  %1082 = vmatpush1.msra.mxu0 0.0
  %1083 = vmatprep.subr.mxu0 0.0
  %1084 = vmatpush1.msra.mxu0 0.0
  %1085 = vmatprep.mubr.f32.mxu0 0.0
  %1086 = vmatmul.mubr.f32.gmra.mrb[0].mxu0 %v1019
  %v1087 = vpop.f32.mrb[0].mxu0
  %v1088 = vadd.f32 0.0, %v1087
  %v1089 = vpop.f32.mrb[0].mxu0
  %1090 = vdwg.mxu0
  %v1091 = vadd.f32 %v1017, %v1088
  %v1092 = vxor.u32 %v1091, 2147483648
  %v1093 = vmul.f32 %v1092, 1.442695
  %v1094 = vpow.pop %v1093
  %v1095 = vadd.f32 %v1094, 1.0
  %v1096 = vrcp.pop %v1095
  %v1097 = vmul.f32 1.0, %v1096
  %v1098 = vtanh.pop %v1091
  %1100 = vrot.lane.b32.xlu0 %v1015, 16
  %v1101 = vpop.permute.xlu0 %1100
  %v1103 = vmul.f32 %v1097, %v1101
  %1105 = vrot.lane.b32.xlu0 %v1098, 96
  %v1106 = vpop.permute.xlu0 %1105
  %v1108 = vmul.f32 %v1097, %v1106
  %1110 = vrot.lane.b32.xlu0 %v1108, 16
  %v1111 = vpop.permute.xlu0 %1110
  %v1113 = vadd.f32 %v1103, %v1111
  %v1114 = vtanh.pop %v1113
  %1116 = vrot.lane.b32.xlu0 %v1114, 32
  %v1117 = vpop.permute.xlu0 %1116
  %v1119 = vmul.f32 %v1097, %v1117
  %1121 = vrot.lane.b32.xlu0 %v1119, 80
  %v1122 = vpop.permute.xlu0 %1121
  %1124 = vst.msk [vmem:[#allocation3] sm:$0xff] %vm184, %v1122
  %1126 = vrot.lane.b32.xlu0 %v1113, 112
  %v1127 = vpop.permute.xlu0 %1126
  %1129 = vst.msk [vmem:[#allocation4] sm:$0xff] %vm184, %v1127
  %s1130 = scalar_lea.vmem %s6, 56
  %1131 = vst.msk [vmem:[%s1130] sm:$0xff] %vm184, %v1122
  %v1132 = vld [vmem:[#allocation4] sm:$0xff]
  %1133 = vst.msk [vmem:[%s7] sm:$0xff] %vm184, %v1132
  // Predicated region
  $region26: #{lmrnn_forward.1} parent=0 // pred_check
    _
  $region27: #{lmrnn_forward.1} parent=0 // pred_check_branch
    %1135 = sbr.rel (0) target = $region29
  $region28: #{lmrnn_forward.1} parent=0 // pred_region
    _
  $region29: #{lmrnn_forward.1} parent=0 // pred_fallthru
    _
  // Predicated region
  $region30: #{lmrnn_forward.1} parent=0 // pred_check
    _
  $region31: #{lmrnn_forward.1} parent=0 // pred_check_branch
    %1137 = sbr.rel (0) target = $region33
  $region32: #{lmrnn_forward.1} parent=0 // pred_region
    _
  $region33: #{lmrnn_forward.1} parent=0 // pred_fallthru
    _
  // Predicated region
  $region34: #{lmrnn_forward.1} parent=0 // pred_check
    _
  $region35: #{lmrnn_forward.1} parent=0 // pred_check_branch
    %1139 = sbr.rel (0) target = $region37
  $region36: #{lmrnn_forward.1} parent=0 // pred_region
    _
  $region37: #{lmrnn_forward.1} parent=0 // pred_fallthru
    _
  // Predicated region
  $region38: #{lmrnn_forward.1} parent=0 // pred_check
    _
  $region39: #{lmrnn_forward.1} parent=0 // pred_check_branch
    %1141 = sbr.rel (0) target = $region41
  $region40: #{lmrnn_forward.1} parent=0 // pred_region
    _
  $region41: #{lmrnn_forward.1} parent=0 // pred_fallthru
    _

</llo_original>
